<compile_context>
chip_gen: v6e
topology: v6e:2x2x1
jax: 0.10.0
libtpu: 0.0.40
codegen_flags: <defaults>
</compile_context>

<pallas_src>
import functools

import jax
import jax.numpy as jnp
from jax import lax
from jax.experimental import pallas as pl
from jax.experimental.pallas import tpu as pltpu


LN_EPS = 1e-5  # PyTorch nn.LayerNorm default


def _round_up(x, m):
    return ((x + m - 1) // m) * m


def _pad_mult(n):
    # v6e/v7x MXU is 2x256^2: use 256-multiples once the real dim is >= 256.
    # 128 otherwise (fully feeds v5e's 4x128^2 and avoids over-padding 32->256).
    return 256 if n >= 256 else 128


def _vmem_capacity_bytes():
    """Per-core VMEM capacity; conservative (v7x) fallback if query fails."""
    try:
        info = pltpu.get_tpu_info()
        cap = getattr(info, "vmem_capacity_bytes", None)
        if cap:
            return int(cap)
    except Exception:
        pass
    return 64 * 1024 * 1024


def _ff_kernel(*refs, n_layers, layer_norm, ln_dim, out_pad, carry_dtype):
    """Fused feed-forward kernel on one (TM, feat) row tile.

    refs layout:
      refs[0]                      : x tile   (TM, dim_in)
      refs[1 + 2*i], refs[2 + 2*i] : W_i^T (in_pad_i, out_pad_i), b_i (1, out_pad_i)
      if layer_norm: refs[-3], refs[-2] : gamma (1, out_pad), beta (1, out_pad)
      refs[-1]                     : output tile (TM, out_pad)
    """
    x_ref = refs[0]
    o_ref = refs[-1]

    h = x_ref[...]
    for i in range(n_layers):
        wT = refs[1 + 2 * i][...]                       # (in_pad, out_pad)
        b = refs[2 + 2 * i][...].astype(jnp.float32)    # (1, out_pad)
        acc = jnp.dot(h.astype(wT.dtype), wT,
                      preferred_element_type=jnp.float32) + b
        if i < n_layers - 1:
            acc = jnp.maximum(acc, 0.0)                 # ReLU
            h = acc.astype(carry_dtype)                 # light inter-layer carry
        else:
            h = acc                                     # keep f32 for LN / cast

    if layer_norm:
        gamma = refs[-3][...].astype(jnp.float32)       # (1, out_pad), 0 in padding
        beta = refs[-2][...].astype(jnp.float32)        # (1, out_pad), 0 in padding
        inv_n = 1.0 / float(ln_dim)
        # Padded output columns are exactly zero (zero weight cols + zero bias),
        # so the sum over the padded axis divided by the real width is the mean.
        mean = jnp.sum(h, axis=-1, keepdims=True) * inv_n
        centered = h - mean
        if out_pad > ln_dim:
            # Two-pass variance: mask padded lanes (where centered == -mean).
            col = lax.broadcasted_iota(jnp.int32, h.shape, 1)
            centered = jnp.where(col < ln_dim, centered, 0.0)
        var = jnp.sum(centered * centered, axis=-1, keepdims=True) * inv_n
        h = centered * lax.rsqrt(var + LN_EPS) * gamma + beta
        # padded lanes: centered==0, gamma==0, beta==0 -> output stays 0

    o_ref[...] = h.astype(o_ref.dtype)


def pack_ff_params(weights, biases, gamma=None, beta=None, *, dim_in,
                   param_dtype=None):
    """Pack PyTorch-layout params once (hoisted out of the forward path).

    weights[i]: (out_i, in_i), biases[i]: (out_i,).  Weights are transposed to
    (in, out) for lane-dense matmuls and feature dims zero-padded to MXU-sized
    multiples.  Optionally casts weights to `param_dtype` (e.g. jnp.bfloat16).
    """
    n_layers = len(weights)
    layer_norm = gamma is not None
    dim_out = int(weights[-1].shape[0])

    params = []
    prev_out_p = int(dim_in)
    widths = [int(dim_in)]
    for w, b in zip(weights, biases):
        out_i, in_i = int(w.shape[0]), int(w.shape[1])
        out_p = _round_up(out_i, _pad_mult(out_i))
        wT = jnp.transpose(w)                                   # (in_i, out_i)
        if param_dtype is not None:
            wT = wT.astype(param_dtype)
        wT = jnp.pad(wT, ((0, prev_out_p - in_i), (0, out_p - out_i)))
        bp = jnp.pad(b.astype(jnp.float32), (0, out_p - out_i)).reshape(1, out_p)
        params.append(wT)
        params.append(bp)
        prev_out_p = out_p
        widths.append(out_p)
    dim_out_p = prev_out_p

    if layer_norm:
        params.append(jnp.pad(gamma.astype(jnp.float32),
                              (0, dim_out_p - dim_out)).reshape(1, dim_out_p))
        params.append(jnp.pad(beta.astype(jnp.float32),
                              (0, dim_out_p - dim_out)).reshape(1, dim_out_p))

    return dict(params=tuple(params), n_layers=n_layers, layer_norm=layer_norm,
                dim_in=int(dim_in), dim_out=dim_out, dim_out_p=dim_out_p,
                widths=tuple(widths))


def feedforward_pallas(x, packed, *, tm_max=512):
    """x: (..., dim_in). `packed` comes from pack_ff_params()."""
    n_layers = packed["n_layers"]
    layer_norm = packed["layer_norm"]
    dim_in = packed["dim_in"]
    dim_out = packed["dim_out"]
    dim_out_p = packed["dim_out_p"]
    widths = packed["widths"]
    params = packed["params"]

    orig_shape = x.shape
    assert int(orig_shape[-1]) == dim_in
    m = 1
    for s in orig_shape[:-1]:
        m *= int(s)
    x2d = x.reshape(m, dim_in)

    in_bytes = jnp.dtype(x.dtype).itemsize
    w_dtype = params[0].dtype
    carry_dtype = jnp.bfloat16 if w_dtype == jnp.bfloat16 else jnp.float32
    carry_bytes = jnp.dtype(carry_dtype).itemsize

    # --- Generation-aware VMEM budgeting.
    vmem_cap = _vmem_capacity_bytes()
    vmem_limit = int(vmem_cap * 0.8)              # headroom for Mosaic scratch
    param_bytes = sum(int(a.size) * jnp.dtype(a.dtype).itemsize for a in params)
    margin = 4 * 1024 * 1024                      # semaphores / internal scratch
    act_budget = vmem_limit - param_bytes - margin
    if act_budget <= 0:
        # TODO(synk): weight-streaming fallback when params don't fit VMEM.
        act_budget = 1 * 1024 * 1024

    max_feat = max(widths)
    per_row_bytes = (2 * dim_in * in_bytes        # double-buffered x tile
                     + 2 * dim_out_p * in_bytes   # double-buffered out tile
                     + max_feat * 4               # f32 accumulator
                     + max_feat * carry_bytes)    # inter-layer carry
    tm = max(8, min(tm_max, (act_budget // per_row_bytes) // 8 * 8))
    # Keep >= 2 row blocks so ("parallel",) can split across v7x's two TCs.
    tm = min(tm, max(8, _round_up(pl.cdiv(m, 2), 8)))
    tm = min(tm, _round_up(m, 8))
    grid_m = pl.cdiv(m, tm)

    kernel = functools.partial(_ff_kernel, n_layers=n_layers,
                               layer_norm=layer_norm, ln_dim=dim_out,
                               out_pad=dim_out_p, carry_dtype=carry_dtype)

    flops = 0
    for i in range(n_layers):
        flops += 2 * m * int(widths[i]) * int(widths[i + 1])
    if layer_norm:
        flops += 8 * m * dim_out
    bytes_accessed = (m * dim_in * in_bytes + param_bytes
                      + m * dim_out_p * in_bytes)
    cost = pl.CostEstimate(flops=flops,
                           transcendentals=(m if layer_norm else 0),
                           bytes_accessed=bytes_accessed)

    def _build_and_call(single_buffer_params):
        # x / out are row-tiled (default double-buffered pipeline); parameters
        # use a constant index_map so they stay resident across grid steps and,
        # when supported, a single buffer (halves resident param VMEM).
        def const_spec(shape):
            imap = (lambda i, nd=len(shape): (0,) * nd)
            if single_buffer_params:
                return pl.BlockSpec(shape, imap, pipeline_mode=pl.Buffered(1))
            return pl.BlockSpec(shape, imap)

        in_specs = [pl.BlockSpec((tm, dim_in), lambda i: (i, 0))]
        in_specs += [const_spec(a.shape) for a in params]
        out_spec = pl.BlockSpec((tm, dim_out_p), lambda i: (i, 0))

        return pl.pallas_call(
            kernel,
            out_shape=jax.ShapeDtypeStruct((m, dim_out_p), x.dtype),
            grid_spec=pltpu.PrefetchScalarGridSpec(
                num_scalar_prefetch=0,
                grid=(grid_m,),
                in_specs=in_specs,
                out_specs=out_spec,
            ),
            compiler_params=pltpu.CompilerParams(
                dimension_semantics=("parallel",),
                vmem_limit_bytes=vmem_limit,
            ),
            cost_estimate=cost,
        )(x2d, *params)

    try:
        out2d_p = _build_and_call(True)
    except Exception:
        # Older jax without pipeline_mode / Buffered(1) support: fall back to
        # the known-good default (double-buffered) parameter specs.
        out2d_p = _build_and_call(False)

    out2d = out2d_p[:, :dim_out] if dim_out_p != dim_out else out2d_p
    return out2d.reshape(orig_shape[:-1] + (dim_out,))


def feedforward(x, weights, biases, gamma=None, beta=None, *,
                param_dtype=None, tm_max=512):
    """Convenience wrapper: packs params then calls the kernel (prefer packing
    once with pack_ff_params() and reusing the packed dict across calls)."""
    packed = pack_ff_params(weights, biases, gamma, beta,
                            dim_in=int(x.shape[-1]), param_dtype=param_dtype)
    return feedforward_pallas(x, packed, tm_max=tm_max)


def feedforward_reference(x, weights, biases, gamma=None, beta=None):
    """Pure-JAX reference matching the PyTorch forward (eval mode)."""
    n_layers = len(weights)
    h = x.astype(jnp.float32)
    for i in range(n_layers):
        h = h @ jnp.transpose(weights[i]).astype(jnp.float32) + biases[i].astype(jnp.float32)
        if i < n_layers - 1:
            h = jnp.maximum(h, 0.0)
    if gamma is not None:
        mean = jnp.mean(h, axis=-1, keepdims=True)
        var = jnp.mean((h - mean) ** 2, axis=-1, keepdims=True)
        h = (h - mean) / jnp.sqrt(var + LN_EPS)
        h = h * gamma + beta
    return h.astype(x.dtype)


if __name__ == "__main__":
    # Module config: FeedForward(dim=32, factor=2, ff_weight_norm=True,
    #                            n_layers=3, layer_norm=True, dropout=0.0)
    dim, factor, n_layers = 32, 2, 3
    batch, seq = 2, 8

    key = jax.random.PRNGKey(0)
    keys = jax.random.split(key, 2 * n_layers + 3)

    weights, biases = [], []
    for i in range(n_layers):
        in_dim = dim if i == 0 else dim * factor
        out_dim = dim if i == n_layers - 1 else dim * factor
        w = jax.random.normal(keys[2 * i], (out_dim, in_dim), jnp.float32) * 0.05
        b = jax.random.normal(keys[2 * i + 1], (out_dim,), jnp.float32) * 0.01
        weights.append(w)
        biases.append(b)

    gamma = jnp.ones((dim,), jnp.float32) + 0.1 * jax.random.normal(
        keys[2 * n_layers], (dim,), jnp.float32)
    beta = 0.1 * jax.random.normal(keys[2 * n_layers + 1], (dim,), jnp.float32)

    x = jax.random.normal(keys[2 * n_layers + 2], (batch, seq, dim), jnp.float32)

    # Pack once (hoisted out of the forward path), then run the fused kernel.
    packed = pack_ff_params(weights, biases, gamma, beta, dim_in=dim)
    out = feedforward_pallas(x, packed)
    out = jax.block_until_ready(out)

    ref = feedforward_reference(x, weights, biases, gamma, beta)
    assert out.shape == (batch, seq, dim), out.shape
    assert jnp.allclose(out, ref, atol=1e-4, rtol=1e-4), float(jnp.max(jnp.abs(out - ref)))

    print("KERNEL_OK")
</pallas_src>

<mosaic_0001>
module attributes {stable_mosaic.version = 11 : i64} {
  func.func @_ff_kernel(%arg0: i32, %arg1: memref<8x32xf32, #tpu.memory_space<vmem>>, %arg2: memref<32x128xf32, #tpu.memory_space<vmem>>, %arg3: memref<1x128xf32, #tpu.memory_space<vmem>>, %arg4: memref<128x128xf32, #tpu.memory_space<vmem>>, %arg5: memref<1x128xf32, #tpu.memory_space<vmem>>, %arg6: memref<128x128xf32, #tpu.memory_space<vmem>>, %arg7: memref<1x128xf32, #tpu.memory_space<vmem>>, %arg8: memref<1x128xf32, #tpu.memory_space<vmem>>, %arg9: memref<1x128xf32, #tpu.memory_space<vmem>>, %arg10: memref<8x128xf32, #tpu.memory_space<vmem>>) attributes {dimension_semantics = [#tpu.dimension_semantics<parallel>], iteration_bounds = array<i64: 2>, scalar_prefetch = 0 : i64, scratch_operands = 0 : i64, tpu.core_type = #tpu.core_type<tc>, window_params = [{transform_indices = @transform_0, window_bounds = array<i64: 8, 32>}, {pipeline_mode = #tpu.pipeline_mode<synchronous>, transform_indices = @transform_1, window_bounds = array<i64: 32, 128>}, {pipeline_mode = #tpu.pipeline_mode<synchronous>, transform_indices = @transform_2, window_bounds = array<i64: 1, 128>}, {pipeline_mode = #tpu.pipeline_mode<synchronous>, transform_indices = @transform_3, window_bounds = array<i64: 128, 128>}, {pipeline_mode = #tpu.pipeline_mode<synchronous>, transform_indices = @transform_4, window_bounds = array<i64: 1, 128>}, {pipeline_mode = #tpu.pipeline_mode<synchronous>, transform_indices = @transform_5, window_bounds = array<i64: 128, 128>}, {pipeline_mode = #tpu.pipeline_mode<synchronous>, transform_indices = @transform_6, window_bounds = array<i64: 1, 128>}, {pipeline_mode = #tpu.pipeline_mode<synchronous>, transform_indices = @transform_7, window_bounds = array<i64: 1, 128>}, {pipeline_mode = #tpu.pipeline_mode<synchronous>, transform_indices = @transform_8, window_bounds = array<i64: 1, 128>}, {transform_indices = @transform_9, window_bounds = array<i64: 8, 128>}]} {
    %c0 = arith.constant 0 : index
    %c0_0 = arith.constant 0 : index
    %0 = vector.load %arg1[%c0, %c0_0] : memref<8x32xf32, #tpu.memory_space<vmem>>, vector<8x32xf32>
    %c0_1 = arith.constant 0 : index
    %c0_2 = arith.constant 0 : index
    %1 = vector.load %arg2[%c0_1, %c0_2] : memref<32x128xf32, #tpu.memory_space<vmem>>, vector<32x128xf32>
    %c0_3 = arith.constant 0 : index
    %c0_4 = arith.constant 0 : index
    %2 = vector.load %arg3[%c0_3, %c0_4] : memref<1x128xf32, #tpu.memory_space<vmem>>, vector<1x128xf32>
    %cst = arith.constant dense<0.000000e+00> : vector<8x128xf32>
    %3 = tpu.matmul %0, %1, %cst {dimension_numbers = #tpu.dot_dimension_numbers<[1], [0], [0], [1], [0, 0, 1, 1], [], []>} : vector<8x32xf32>, vector<32x128xf32>, vector<8x128xf32> -> vector<8x128xf32>
    %4 = vector.broadcast %2 : vector<1x128xf32> to vector<8x128xf32>
    %5 = arith.addf %3, %4 : vector<8x128xf32>
    %cst_5 = arith.constant 0.000000e+00 : f32
    %6 = vector.broadcast %cst_5 : f32 to vector<8x128xf32>
    %7 = arith.maximumf %5, %6 : vector<8x128xf32>
    %c0_6 = arith.constant 0 : index
    %c0_7 = arith.constant 0 : index
    %8 = vector.load %arg4[%c0_6, %c0_7] : memref<128x128xf32, #tpu.memory_space<vmem>>, vector<128x128xf32>
    %c0_8 = arith.constant 0 : index
    %c0_9 = arith.constant 0 : index
    %9 = vector.load %arg5[%c0_8, %c0_9] : memref<1x128xf32, #tpu.memory_space<vmem>>, vector<1x128xf32>
    %cst_10 = arith.constant dense<0.000000e+00> : vector<8x128xf32>
    %10 = tpu.matmul %7, %8, %cst_10 {dimension_numbers = #tpu.dot_dimension_numbers<[1], [0], [0], [1], [0, 0, 1, 1], [], []>} : vector<8x128xf32>, vector<128x128xf32>, vector<8x128xf32> -> vector<8x128xf32>
    %11 = vector.broadcast %9 : vector<1x128xf32> to vector<8x128xf32>
    %12 = arith.addf %10, %11 : vector<8x128xf32>
    %cst_11 = arith.constant 0.000000e+00 : f32
    %13 = vector.broadcast %cst_11 : f32 to vector<8x128xf32>
    %14 = arith.maximumf %12, %13 : vector<8x128xf32>
    %c0_12 = arith.constant 0 : index
    %c0_13 = arith.constant 0 : index
    %15 = vector.load %arg6[%c0_12, %c0_13] : memref<128x128xf32, #tpu.memory_space<vmem>>, vector<128x128xf32>
    %c0_14 = arith.constant 0 : index
    %c0_15 = arith.constant 0 : index
    %16 = vector.load %arg7[%c0_14, %c0_15] : memref<1x128xf32, #tpu.memory_space<vmem>>, vector<1x128xf32>
    %cst_16 = arith.constant dense<0.000000e+00> : vector<8x128xf32>
    %17 = tpu.matmul %14, %15, %cst_16 {dimension_numbers = #tpu.dot_dimension_numbers<[1], [0], [0], [1], [0, 0, 1, 1], [], []>} : vector<8x128xf32>, vector<128x128xf32>, vector<8x128xf32> -> vector<8x128xf32>
    %18 = vector.broadcast %16 : vector<1x128xf32> to vector<8x128xf32>
    %19 = arith.addf %17, %18 : vector<8x128xf32>
    %c0_17 = arith.constant 0 : index
    %c0_18 = arith.constant 0 : index
    %20 = vector.load %arg8[%c0_17, %c0_18] : memref<1x128xf32, #tpu.memory_space<vmem>>, vector<1x128xf32>
    %c0_19 = arith.constant 0 : index
    %c0_20 = arith.constant 0 : index
    %21 = vector.load %arg9[%c0_19, %c0_20] : memref<1x128xf32, #tpu.memory_space<vmem>>, vector<1x128xf32>
    %cst_21 = arith.constant dense<0.000000e+00> : vector<8xf32>
    %22 = vector.multi_reduction <add>, %19, %cst_21 [1] : vector<8x128xf32> to vector<8xf32>
    %23 = vector.shape_cast %22 : vector<8xf32> to vector<8x1xf32>
    %cst_22 = arith.constant 3.125000e-02 : f32
    %24 = vector.broadcast %cst_22 : f32 to vector<8x1xf32>
    %25 = arith.mulf %23, %24 : vector<8x1xf32>
    %26 = vector.broadcast %25 : vector<8x1xf32> to vector<8x128xf32>
    %27 = arith.subf %19, %26 : vector<8x128xf32>
    %28 = tpu.iota {dimensions = array<i32: 1>} : vector<8x128xi32>
    %c32_i32 = arith.constant 32 : i32
    %29 = vector.broadcast %c32_i32 : i32 to vector<8x128xi32>
    %30 = arith.cmpi slt, %28, %29 : vector<8x128xi32>
    %cst_23 = arith.constant 0.000000e+00 : f32
    %31 = vector.broadcast %cst_23 : f32 to vector<8x128xf32>
    %32 = arith.select %30, %27, %31 : vector<8x128xi1>, vector<8x128xf32>
    %33 = arith.mulf %32, %32 : vector<8x128xf32>
    %cst_24 = arith.constant dense<0.000000e+00> : vector<8xf32>
    %34 = vector.multi_reduction <add>, %33, %cst_24 [1] : vector<8x128xf32> to vector<8xf32>
    %35 = vector.shape_cast %34 : vector<8xf32> to vector<8x1xf32>
    %cst_25 = arith.constant 3.125000e-02 : f32
    %36 = vector.broadcast %cst_25 : f32 to vector<8x1xf32>
    %37 = arith.mulf %35, %36 : vector<8x1xf32>
    %cst_26 = arith.constant 9.99999974E-6 : f32
    %38 = vector.broadcast %cst_26 : f32 to vector<8x1xf32>
    %39 = arith.addf %37, %38 : vector<8x1xf32>
    %40 = math.rsqrt %39 : vector<8x1xf32>
    %41 = vector.broadcast %40 : vector<8x1xf32> to vector<8x128xf32>
    %42 = arith.mulf %32, %41 : vector<8x128xf32>
    %43 = vector.broadcast %20 : vector<1x128xf32> to vector<8x128xf32>
    %44 = arith.mulf %42, %43 : vector<8x128xf32>
    %45 = vector.broadcast %21 : vector<1x128xf32> to vector<8x128xf32>
    %46 = arith.addf %44, %45 : vector<8x128xf32>
    %c0_27 = arith.constant 0 : index
    %c0_28 = arith.constant 0 : index
    %47 = vector.load %arg10[%c0_27, %c0_28] : memref<8x128xf32, #tpu.memory_space<vmem>>, vector<8x128xf32>
    tpu.vector_store %arg10[%c0_27, %c0_28], %46 {strides = array<i32>} : memref<8x128xf32, #tpu.memory_space<vmem>>, vector<8x128xf32>,
    return
  }
  func.func @transform_0(%arg0: i32) -> (i32, i32) {
    %c0_i32 = arith.constant 0 : i32
    %c0_i32_0 = arith.constant 0 : i32
    return %arg0, %c0_i32 : i32, i32
  }
  func.func @transform_1(%arg0: i32) -> (i32, i32) {
    %c0_i32 = arith.constant 0 : i32
    %c0_i32_0 = arith.constant 0 : i32
    %c0_i32_1 = arith.constant 0 : i32
    return %c0_i32, %c0_i32_0 : i32, i32
  }
  func.func @transform_2(%arg0: i32) -> (i32, i32) {
    %c0_i32 = arith.constant 0 : i32
    %c0_i32_0 = arith.constant 0 : i32
    %c0_i32_1 = arith.constant 0 : i32
    return %c0_i32, %c0_i32_0 : i32, i32
  }
  func.func @transform_3(%arg0: i32) -> (i32, i32) {
    %c0_i32 = arith.constant 0 : i32
    %c0_i32_0 = arith.constant 0 : i32
    %c0_i32_1 = arith.constant 0 : i32
    return %c0_i32, %c0_i32_0 : i32, i32
  }
  func.func @transform_4(%arg0: i32) -> (i32, i32) {
    %c0_i32 = arith.constant 0 : i32
    %c0_i32_0 = arith.constant 0 : i32
    %c0_i32_1 = arith.constant 0 : i32
    return %c0_i32, %c0_i32_0 : i32, i32
  }
  func.func @transform_5(%arg0: i32) -> (i32, i32) {
    %c0_i32 = arith.constant 0 : i32
    %c0_i32_0 = arith.constant 0 : i32
    %c0_i32_1 = arith.constant 0 : i32
    return %c0_i32, %c0_i32_0 : i32, i32
  }
  func.func @transform_6(%arg0: i32) -> (i32, i32) {
    %c0_i32 = arith.constant 0 : i32
    %c0_i32_0 = arith.constant 0 : i32
    %c0_i32_1 = arith.constant 0 : i32
    return %c0_i32, %c0_i32_0 : i32, i32
  }
  func.func @transform_7(%arg0: i32) -> (i32, i32) {
    %c0_i32 = arith.constant 0 : i32
    %c0_i32_0 = arith.constant 0 : i32
    %c0_i32_1 = arith.constant 0 : i32
    return %c0_i32, %c0_i32_0 : i32, i32
  }
  func.func @transform_8(%arg0: i32) -> (i32, i32) {
    %c0_i32 = arith.constant 0 : i32
    %c0_i32_0 = arith.constant 0 : i32
    %c0_i32_1 = arith.constant 0 : i32
    return %c0_i32, %c0_i32_0 : i32, i32
  }
  func.func @transform_9(%arg0: i32) -> (i32, i32) {
    %c0_i32 = arith.constant 0 : i32
    %c0_i32_0 = arith.constant 0 : i32
    return %arg0, %c0_i32 : i32, i32
  }
}

module attributes {stable_mosaic.version = 11 : i64} {
  func.func @_ff_kernel(%arg0: i32, %arg1: memref<8x32xf32, #tpu.memory_space<vmem>>, %arg2: memref<32x128xf32, #tpu.memory_space<vmem>>, %arg3: memref<1x128xf32, #tpu.memory_space<vmem>>, %arg4: memref<128x128xf32, #tpu.memory_space<vmem>>, %arg5: memref<1x128xf32, #tpu.memory_space<vmem>>, %arg6: memref<128x128xf32, #tpu.memory_space<vmem>>, %arg7: memref<1x128xf32, #tpu.memory_space<vmem>>, %arg8: memref<1x128xf32, #tpu.memory_space<vmem>>, %arg9: memref<1x128xf32, #tpu.memory_space<vmem>>, %arg10: memref<8x128xf32, #tpu.memory_space<vmem>>) attributes {dimension_semantics = [#tpu.dimension_semantics<parallel>], iteration_bounds = array<i64: 2>, scalar_prefetch = 0 : i64, scratch_operands = 0 : i64, tpu.core_type = #tpu.core_type<tc>, window_params = [{transform_indices = @transform_0, window_bounds = array<i64: 8, 32>}, {pipeline_mode = #tpu.pipeline_mode<synchronous>, transform_indices = @transform_1, window_bounds = array<i64: 32, 128>}, {pipeline_mode = #tpu.pipeline_mode<synchronous>, transform_indices = @transform_2, window_bounds = array<i64: 1, 128>}, {pipeline_mode = #tpu.pipeline_mode<synchronous>, transform_indices = @transform_3, window_bounds = array<i64: 128, 128>}, {pipeline_mode = #tpu.pipeline_mode<synchronous>, transform_indices = @transform_4, window_bounds = array<i64: 1, 128>}, {pipeline_mode = #tpu.pipeline_mode<synchronous>, transform_indices = @transform_5, window_bounds = array<i64: 128, 128>}, {pipeline_mode = #tpu.pipeline_mode<synchronous>, transform_indices = @transform_6, window_bounds = array<i64: 1, 128>}, {pipeline_mode = #tpu.pipeline_mode<synchronous>, transform_indices = @transform_7, window_bounds = array<i64: 1, 128>}, {pipeline_mode = #tpu.pipeline_mode<synchronous>, transform_indices = @transform_8, window_bounds = array<i64: 1, 128>}, {transform_indices = @transform_9, window_bounds = array<i64: 8, 128>}]} {
    %c0 = arith.constant 0 : index
    %c0_0 = arith.constant 0 : index
    %0 = vector.load %arg1[%c0, %c0_0] : memref<8x32xf32, #tpu.memory_space<vmem>>, vector<8x32xf32>
    %c0_1 = arith.constant 0 : index
    %c0_2 = arith.constant 0 : index
    %1 = vector.load %arg2[%c0_1, %c0_2] : memref<32x128xf32, #tpu.memory_space<vmem>>, vector<32x128xf32>
    %c0_3 = arith.constant 0 : index
    %c0_4 = arith.constant 0 : index
    %2 = vector.load %arg3[%c0_3, %c0_4] : memref<1x128xf32, #tpu.memory_space<vmem>>, vector<1x128xf32>
    %cst = arith.constant dense<0.000000e+00> : vector<8x128xf32>
    %3 = tpu.matmul %0, %1, %cst {dimension_numbers = #tpu.dot_dimension_numbers<[1], [0], [0], [1], [0, 0, 1, 1], [], []>} : vector<8x32xf32>, vector<32x128xf32>, vector<8x128xf32> -> vector<8x128xf32>
    %4 = vector.broadcast %2 : vector<1x128xf32> to vector<8x128xf32>
    %5 = arith.addf %3, %4 : vector<8x128xf32>
    %cst_5 = arith.constant 0.000000e+00 : f32
    %6 = vector.broadcast %cst_5 : f32 to vector<8x128xf32>
    %7 = arith.maximumf %5, %6 : vector<8x128xf32>
    %c0_6 = arith.constant 0 : index
    %c0_7 = arith.constant 0 : index
    %8 = vector.load %arg4[%c0_6, %c0_7] : memref<128x128xf32, #tpu.memory_space<vmem>>, vector<128x128xf32>
    %c0_8 = arith.constant 0 : index
    %c0_9 = arith.constant 0 : index
    %9 = vector.load %arg5[%c0_8, %c0_9] : memref<1x128xf32, #tpu.memory_space<vmem>>, vector<1x128xf32>
    %cst_10 = arith.constant dense<0.000000e+00> : vector<8x128xf32>
    %10 = tpu.matmul %7, %8, %cst_10 {dimension_numbers = #tpu.dot_dimension_numbers<[1], [0], [0], [1], [0, 0, 1, 1], [], []>} : vector<8x128xf32>, vector<128x128xf32>, vector<8x128xf32> -> vector<8x128xf32>
    %11 = vector.broadcast %9 : vector<1x128xf32> to vector<8x128xf32>
    %12 = arith.addf %10, %11 : vector<8x128xf32>
    %cst_11 = arith.constant 0.000000e+00 : f32
    %13 = vector.broadcast %cst_11 : f32 to vector<8x128xf32>
    %14 = arith.maximumf %12, %13 : vector<8x128xf32>
    %c0_12 = arith.constant 0 : index
    %c0_13 = arith.constant 0 : index
    %15 = vector.load %arg6[%c0_12, %c0_13] : memref<128x128xf32, #tpu.memory_space<vmem>>, vector<128x128xf32>
    %c0_14 = arith.constant 0 : index
    %c0_15 = arith.constant 0 : index
    %16 = vector.load %arg7[%c0_14, %c0_15] : memref<1x128xf32, #tpu.memory_space<vmem>>, vector<1x128xf32>
    %cst_16 = arith.constant dense<0.000000e+00> : vector<8x128xf32>
    %17 = tpu.matmul %14, %15, %cst_16 {dimension_numbers = #tpu.dot_dimension_numbers<[1], [0], [0], [1], [0, 0, 1, 1], [], []>} : vector<8x128xf32>, vector<128x128xf32>, vector<8x128xf32> -> vector<8x128xf32>
    %18 = vector.broadcast %16 : vector<1x128xf32> to vector<8x128xf32>
    %19 = arith.addf %17, %18 : vector<8x128xf32>
    %c0_17 = arith.constant 0 : index
    %c0_18 = arith.constant 0 : index
    %20 = vector.load %arg8[%c0_17, %c0_18] : memref<1x128xf32, #tpu.memory_space<vmem>>, vector<1x128xf32>
    %c0_19 = arith.constant 0 : index
    %c0_20 = arith.constant 0 : index
    %21 = vector.load %arg9[%c0_19, %c0_20] : memref<1x128xf32, #tpu.memory_space<vmem>>, vector<1x128xf32>
    %cst_21 = arith.constant dense<0.000000e+00> : vector<8xf32>
    %22 = vector.multi_reduction <add>, %19, %cst_21 [1] : vector<8x128xf32> to vector<8xf32>
    %23 = vector.shape_cast %22 : vector<8xf32> to vector<8x1xf32>
    %cst_22 = arith.constant 3.125000e-02 : f32
    %24 = vector.broadcast %cst_22 : f32 to vector<8x1xf32>
    %25 = arith.mulf %23, %24 : vector<8x1xf32>
    %26 = vector.broadcast %25 : vector<8x1xf32> to vector<8x128xf32>
    %27 = arith.subf %19, %26 : vector<8x128xf32>
    %28 = tpu.iota {dimensions = array<i32: 1>} : vector<8x128xi32>
    %c32_i32 = arith.constant 32 : i32
    %29 = vector.broadcast %c32_i32 : i32 to vector<8x128xi32>
    %30 = arith.cmpi slt, %28, %29 : vector<8x128xi32>
    %cst_23 = arith.constant 0.000000e+00 : f32
    %31 = vector.broadcast %cst_23 : f32 to vector<8x128xf32>
    %32 = arith.select %30, %27, %31 : vector<8x128xi1>, vector<8x128xf32>
    %33 = arith.mulf %32, %32 : vector<8x128xf32>
    %cst_24 = arith.constant dense<0.000000e+00> : vector<8xf32>
    %34 = vector.multi_reduction <add>, %33, %cst_24 [1] : vector<8x128xf32> to vector<8xf32>
    %35 = vector.shape_cast %34 : vector<8xf32> to vector<8x1xf32>
    %cst_25 = arith.constant 3.125000e-02 : f32
    %36 = vector.broadcast %cst_25 : f32 to vector<8x1xf32>
    %37 = arith.mulf %35, %36 : vector<8x1xf32>
    %cst_26 = arith.constant 9.99999974E-6 : f32
    %38 = vector.broadcast %cst_26 : f32 to vector<8x1xf32>
    %39 = arith.addf %37, %38 : vector<8x1xf32>
    %40 = math.rsqrt %39 : vector<8x1xf32>
    %41 = vector.broadcast %40 : vector<8x1xf32> to vector<8x128xf32>
    %42 = arith.mulf %32, %41 : vector<8x128xf32>
    %43 = vector.broadcast %20 : vector<1x128xf32> to vector<8x128xf32>
    %44 = arith.mulf %42, %43 : vector<8x128xf32>
    %45 = vector.broadcast %21 : vector<1x128xf32> to vector<8x128xf32>
    %46 = arith.addf %44, %45 : vector<8x128xf32>
    %c0_27 = arith.constant 0 : index
    %c0_28 = arith.constant 0 : index
    %47 = vector.load %arg10[%c0_27, %c0_28] : memref<8x128xf32, #tpu.memory_space<vmem>>, vector<8x128xf32>
    tpu.vector_store %arg10[%c0_27, %c0_28], %46 {strides = array<i32>} : memref<8x128xf32, #tpu.memory_space<vmem>>, vector<8x128xf32>,
    return
  }
  func.func @transform_0(%arg0: i32) -> (i32, i32) {
    %c0_i32 = arith.constant 0 : i32
    %c0_i32_0 = arith.constant 0 : i32
    return %arg0, %c0_i32 : i32, i32
  }
  func.func @transform_1(%arg0: i32) -> (i32, i32) {
    %c0_i32 = arith.constant 0 : i32
    %c0_i32_0 = arith.constant 0 : i32
    %c0_i32_1 = arith.constant 0 : i32
    return %c0_i32, %c0_i32_0 : i32, i32
  }
  func.func @transform_2(%arg0: i32) -> (i32, i32) {
    %c0_i32 = arith.constant 0 : i32
    %c0_i32_0 = arith.constant 0 : i32
    %c0_i32_1 = arith.constant 0 : i32
    return %c0_i32, %c0_i32_0 : i32, i32
  }
  func.func @transform_3(%arg0: i32) -> (i32, i32) {
    %c0_i32 = arith.constant 0 : i32
    %c0_i32_0 = arith.constant 0 : i32
    %c0_i32_1 = arith.constant 0 : i32
    return %c0_i32, %c0_i32_0 : i32, i32
  }
  func.func @transform_4(%arg0: i32) -> (i32, i32) {
    %c0_i32 = arith.constant 0 : i32
    %c0_i32_0 = arith.constant 0 : i32
    %c0_i32_1 = arith.constant 0 : i32
    return %c0_i32, %c0_i32_0 : i32, i32
  }
  func.func @transform_5(%arg0: i32) -> (i32, i32) {
    %c0_i32 = arith.constant 0 : i32
    %c0_i32_0 = arith.constant 0 : i32
    %c0_i32_1 = arith.constant 0 : i32
    return %c0_i32, %c0_i32_0 : i32, i32
  }
  func.func @transform_6(%arg0: i32) -> (i32, i32) {
    %c0_i32 = arith.constant 0 : i32
    %c0_i32_0 = arith.constant 0 : i32
    %c0_i32_1 = arith.constant 0 : i32
    return %c0_i32, %c0_i32_0 : i32, i32
  }
  func.func @transform_7(%arg0: i32) -> (i32, i32) {
    %c0_i32 = arith.constant 0 : i32
    %c0_i32_0 = arith.constant 0 : i32
    %c0_i32_1 = arith.constant 0 : i32
    return %c0_i32, %c0_i32_0 : i32, i32
  }
  func.func @transform_8(%arg0: i32) -> (i32, i32) {
    %c0_i32 = arith.constant 0 : i32
    %c0_i32_0 = arith.constant 0 : i32
    %c0_i32_1 = arith.constant 0 : i32
    return %c0_i32, %c0_i32_0 : i32, i32
  }
  func.func @transform_9(%arg0: i32) -> (i32, i32) {
    %c0_i32 = arith.constant 0 : i32
    %c0_i32_0 = arith.constant 0 : i32
    return %arg0, %c0_i32 : i32, i32
  }
}

</mosaic_0001>

<llo_original>
// kernel: tpu_custom_call.1
$region0: #{tpu_custom_call.1}
  #allocation0 [shape = 'u32[]', space=smem, size = 0x4, offset = 0x4, fixed_abs, tag = 'smem constant byte address 0x4 - core index']
  #allocation1 [shape = 'u32[144,128]{1,0:T(1,128)}', space=vmem, size = 0x12000, scoped, tag = 'internal scratch']
  %s0 = inlined_call_operand.hbm [shape: f32[16,32], index: 0, kind: input, shape index: {}]
  %s1 = inlined_call_operand.hbm [shape: f32[32,128], index: 1, kind: input, shape index: {}]
  %s2 = inlined_call_operand.vmem [shape: f32[1,128], index: 2, kind: input, shape index: {}]
  %s3 = inlined_call_operand.hbm [shape: f32[128,128], index: 3, kind: input, shape index: {}]
  %s4 = inlined_call_operand.vmem [shape: f32[1,128], index: 4, kind: input, shape index: {}]
  %s5 = inlined_call_operand.hbm [shape: f32[128,128], index: 5, kind: input, shape index: {}]
  %s6 = inlined_call_operand.vmem [shape: f32[1,128], index: 6, kind: input, shape index: {}]
  %s7 = inlined_call_operand.vmem [shape: f32[1,128], index: 7, kind: input, shape index: {}]
  %s8 = inlined_call_operand.vmem [shape: f32[1,128], index: 8, kind: input, shape index: {}]
  %s9 = inlined_call_operand.hbm [shape: f32[16,128], index: 9, kind: output, shape index: {}]
  %s10 = sld [smem:[#allocation0]]
  $region85: #{tpu_custom_call.1} parent=0
    _
  %s12 = ssub.s32 1, %s10
  %s13 = scalar_select 0, %s12, %s10
  $region1: #{tpu_custom_call.1} parent=0
    #allocation2 [shape = 'u8[8192]{0}', space=vmem, size = 0x2000, scoped, tag = 'input window, operand 0']
    #allocation3 [shape = 's32[2]{0}', space=sflag, size = 0x8, scoped, tag = 'scoped memory for tpu_custom_call.1']
    #allocation4 [shape = 's32[2]{0}', space=sflag, size = 0x8, scoped, tag = 'scoped memory for tpu_custom_call.1']
    #allocation5 [shape = 'u8[16384]{0}', space=vmem, size = 0x4000, scoped, tag = 'input window, operand 1, single buffered']
    #allocation6 [shape = 's32[1]{0}', space=sflag, size = 0x4, scoped, tag = 'scoped memory for tpu_custom_call.1']
    #allocation7 [shape = 'u8[65536]{0}', space=vmem, size = 0x10000, scoped, tag = 'input window, operand 3, single buffered']
    #allocation8 [shape = 'u8[65536]{0}', space=vmem, size = 0x10000, scoped, tag = 'input window, operand 5, single buffered']
    #allocation9 [shape = 's32[1]{0}', space=sflag, size = 0x4, scoped, tag = 'scoped memory for tpu_custom_call.1']
    #allocation10 [shape = 'u8[8192]{0}', space=vmem, size = 0x2000, scoped, tag = 'output window, operand 0']
    %14 = vsyncpa [#allocation3], 0
    %s15 = scalar_lea.sflag [#allocation3], 1
    %16 = vsyncpa %s15, 0
    %17 = vsyncpa [#allocation6], 0
    %18 = vsyncpa [#allocation9], 0
    %19 = vsyncpa [#allocation4], 0
    %s20 = scalar_lea.sflag [#allocation4], 1
    %21 = vsyncpa %s20, 0
    loop: start=0, step=1, limit=4
    $region2: #{tpu_custom_call.1} parent=1 // loop_pre_header
      _
    $region3: #{tpu_custom_call.1} parent=1 // loop_header
      %s23 = sphi 0, %s27
      %p24 = scmp.ge.s32.totalorder %s23, 4
      %s33 = sphi 0, %s35
      %s36 = sphi 0, %s33
      %s37 = sphi 0, %s36
      %s53 = sphi 0, %s37
      %s57 = sphi 0, %s57
      %s59 = sphi 0, %s57
      %s60 = sphi 0, %s59
      %s74 = sphi 0, %s60
      %s78 = sphi 0, %s78
      %s80 = sphi 0, %s78
      %s81 = sphi 0, %s80
      %s95 = sphi 0, %s81
      %s99 = sphi 0, %s99
      %s101 = sphi 0, %s99
      %s102 = sphi 0, %s101
      %s116 = sphi 0, %s102
      %s120 = sphi 0, %s120
      %s122 = sphi 0, %s120
      %s123 = sphi 0, %s122
      %s137 = sphi 0, %s123
      %s141 = sphi 0, %s141
      %s143 = sphi 0, %s141
      %s144 = sphi 0, %s143
      %s158 = sphi 0, %s144
      %s162 = sphi 0, %s162
      %s164 = sphi 0, %s162
      %s165 = sphi 0, %s164
      %s179 = sphi 0, %s165
      %s183 = sphi 0, %s183
      %s185 = sphi 0, %s183
      %s186 = sphi 0, %s185
      %s200 = sphi 0, %s186
      %s204 = sphi 0, %s204
      %s206 = sphi 0, %s204
      %s207 = sphi 0, %s206
      %s221 = sphi 0, %s207
      %s227 = sphi 0, %s229
      %s230 = sphi 0, %s227
      %s231 = sphi 0, %s230
      %s247 = sphi 0, %s231
    $region4: #{tpu_custom_call.1} parent=1 // loop_header_branch
      %26 = sbr.rel (%p24) target = $region8
    $region5: #{tpu_custom_call.1} parent=1 // loop_body
      %s28 = ssub.s32 %s23, 1
      %s29 = ssub.s32 %s23, 2
      %s30 = sadd.s32 %s23, 1
      %s31 = ssub.s32 %s23, %s30
      %p32 = scmp.eq.s32.totalorder %s31, 0
      %s34 = sadd.s32 %s33, 1
      %s35 = scalar_select %p32, %s33, %s34
      %p38 = pneg %p32
      %p39 = scmp.eq.s32.totalorder %s23, 1
      %p40 = por %p38, %p39
      %p41 = scmp.ne.s32.totalorder %s33, %s36
      %p42 = scmp.eq.s32.totalorder %s23, 0
      %p43 = por %p41, %p42
      %p44 = scmp.ne.s32.totalorder %s33, %s36
      %p45 = scmp.eq.s32.totalorder %s28, 1
      %p46 = por %p44, %p45
      %p47 = scmp.ne.s32.totalorder %s36, %s37
      %p48 = scmp.eq.s32.totalorder %s28, 0
      %p49 = por %p47, %p48
      %p50 = scmp.ne.s32.totalorder %s36, %s37
      %p51 = scmp.eq.s32.totalorder %s29, 1
      %p52 = por %p50, %p51
      %p54 = scmp.ne.s32.totalorder %s37, %s53
      %p55 = scmp.eq.s32.totalorder %s29, 0
      %p56 = por %p54, %p55
      %s58 = sadd.s32 %s57, 1
      %p61 = scmp.eq.s32.totalorder %s23, 1
      %p62 = scmp.ne.s32.totalorder %s57, %s59
      %p63 = scmp.eq.s32.totalorder %s23, 0
      %p64 = por %p62, %p63
      %p65 = scmp.ne.s32.totalorder %s57, %s59
      %p66 = scmp.eq.s32.totalorder %s28, 1
      %p67 = por %p65, %p66
      %p68 = scmp.ne.s32.totalorder %s59, %s60
      %p69 = scmp.eq.s32.totalorder %s28, 0
      %p70 = por %p68, %p69
      %p71 = scmp.ne.s32.totalorder %s59, %s60
      %p72 = scmp.eq.s32.totalorder %s29, 1
      %p73 = por %p71, %p72
      %p75 = scmp.ne.s32.totalorder %s60, %s74
      %p76 = scmp.eq.s32.totalorder %s29, 0
      %p77 = por %p75, %p76
      %s79 = sadd.s32 %s78, 1
      %p82 = scmp.eq.s32.totalorder %s23, 1
      %p83 = scmp.ne.s32.totalorder %s78, %s80
      %p84 = scmp.eq.s32.totalorder %s23, 0
      %p85 = por %p83, %p84
      %p86 = scmp.ne.s32.totalorder %s78, %s80
      %p87 = scmp.eq.s32.totalorder %s28, 1
      %p88 = por %p86, %p87
      %p89 = scmp.ne.s32.totalorder %s80, %s81
      %p90 = scmp.eq.s32.totalorder %s28, 0
      %p91 = por %p89, %p90
      %p92 = scmp.ne.s32.totalorder %s80, %s81
      %p93 = scmp.eq.s32.totalorder %s29, 1
      %p94 = por %p92, %p93
      %p96 = scmp.ne.s32.totalorder %s81, %s95
      %p97 = scmp.eq.s32.totalorder %s29, 0
      %p98 = por %p96, %p97
      %s100 = sadd.s32 %s99, 1
      %p103 = scmp.eq.s32.totalorder %s23, 1
      %p104 = scmp.ne.s32.totalorder %s99, %s101
      %p105 = scmp.eq.s32.totalorder %s23, 0
      %p106 = por %p104, %p105
      %p107 = scmp.ne.s32.totalorder %s99, %s101
      %p108 = scmp.eq.s32.totalorder %s28, 1
      %p109 = por %p107, %p108
      %p110 = scmp.ne.s32.totalorder %s101, %s102
      %p111 = scmp.eq.s32.totalorder %s28, 0
      %p112 = por %p110, %p111
      %p113 = scmp.ne.s32.totalorder %s101, %s102
      %p114 = scmp.eq.s32.totalorder %s29, 1
      %p115 = por %p113, %p114
      %p117 = scmp.ne.s32.totalorder %s102, %s116
      %p118 = scmp.eq.s32.totalorder %s29, 0
      %p119 = por %p117, %p118
      %s121 = sadd.s32 %s120, 1
      %p124 = scmp.eq.s32.totalorder %s23, 1
      %p125 = scmp.ne.s32.totalorder %s120, %s122
      %p126 = scmp.eq.s32.totalorder %s23, 0
      %p127 = por %p125, %p126
      %p128 = scmp.ne.s32.totalorder %s120, %s122
      %p129 = scmp.eq.s32.totalorder %s28, 1
      %p130 = por %p128, %p129
      %p131 = scmp.ne.s32.totalorder %s122, %s123
      %p132 = scmp.eq.s32.totalorder %s28, 0
      %p133 = por %p131, %p132
      %p134 = scmp.ne.s32.totalorder %s122, %s123
      %p135 = scmp.eq.s32.totalorder %s29, 1
      %p136 = por %p134, %p135
      %p138 = scmp.ne.s32.totalorder %s123, %s137
      %p139 = scmp.eq.s32.totalorder %s29, 0
      %p140 = por %p138, %p139
      %s142 = sadd.s32 %s141, 1
      %p145 = scmp.eq.s32.totalorder %s23, 1
      %p146 = scmp.ne.s32.totalorder %s141, %s143
      %p147 = scmp.eq.s32.totalorder %s23, 0
      %p148 = por %p146, %p147
      %p149 = scmp.ne.s32.totalorder %s141, %s143
      %p150 = scmp.eq.s32.totalorder %s28, 1
      %p151 = por %p149, %p150
      %p152 = scmp.ne.s32.totalorder %s143, %s144
      %p153 = scmp.eq.s32.totalorder %s28, 0
      %p154 = por %p152, %p153
      %p155 = scmp.ne.s32.totalorder %s143, %s144
      %p156 = scmp.eq.s32.totalorder %s29, 1
      %p157 = por %p155, %p156
      %p159 = scmp.ne.s32.totalorder %s144, %s158
      %p160 = scmp.eq.s32.totalorder %s29, 0
      %p161 = por %p159, %p160
      %s163 = sadd.s32 %s162, 1
      %p166 = scmp.eq.s32.totalorder %s23, 1
      %p167 = scmp.ne.s32.totalorder %s162, %s164
      %p168 = scmp.eq.s32.totalorder %s23, 0
      %p169 = por %p167, %p168
      %p170 = scmp.ne.s32.totalorder %s162, %s164
      %p171 = scmp.eq.s32.totalorder %s28, 1
      %p172 = por %p170, %p171
      %p173 = scmp.ne.s32.totalorder %s164, %s165
      %p174 = scmp.eq.s32.totalorder %s28, 0
      %p175 = por %p173, %p174
      %p176 = scmp.ne.s32.totalorder %s164, %s165
      %p177 = scmp.eq.s32.totalorder %s29, 1
      %p178 = por %p176, %p177
      %p180 = scmp.ne.s32.totalorder %s165, %s179
      %p181 = scmp.eq.s32.totalorder %s29, 0
      %p182 = por %p180, %p181
      %s184 = sadd.s32 %s183, 1
      %p187 = scmp.eq.s32.totalorder %s23, 1
      %p188 = scmp.ne.s32.totalorder %s183, %s185
      %p189 = scmp.eq.s32.totalorder %s23, 0
      %p190 = por %p188, %p189
      %p191 = scmp.ne.s32.totalorder %s183, %s185
      %p192 = scmp.eq.s32.totalorder %s28, 1
      %p193 = por %p191, %p192
      %p194 = scmp.ne.s32.totalorder %s185, %s186
      %p195 = scmp.eq.s32.totalorder %s28, 0
      %p196 = por %p194, %p195
      %p197 = scmp.ne.s32.totalorder %s185, %s186
      %p198 = scmp.eq.s32.totalorder %s29, 1
      %p199 = por %p197, %p198
      %p201 = scmp.ne.s32.totalorder %s186, %s200
      %p202 = scmp.eq.s32.totalorder %s29, 0
      %p203 = por %p201, %p202
      %s205 = sadd.s32 %s204, 1
      %p208 = scmp.eq.s32.totalorder %s23, 1
      %p209 = scmp.ne.s32.totalorder %s204, %s206
      %p210 = scmp.eq.s32.totalorder %s23, 0
      %p211 = por %p209, %p210
      %p212 = scmp.ne.s32.totalorder %s204, %s206
      %p213 = scmp.eq.s32.totalorder %s28, 1
      %p214 = por %p212, %p213
      %p215 = scmp.ne.s32.totalorder %s206, %s207
      %p216 = scmp.eq.s32.totalorder %s28, 0
      %p217 = por %p215, %p216
      %p218 = scmp.ne.s32.totalorder %s206, %s207
      %p219 = scmp.eq.s32.totalorder %s29, 1
      %p220 = por %p218, %p219
      %p222 = scmp.ne.s32.totalorder %s207, %s221
      %p223 = scmp.eq.s32.totalorder %s29, 0
      %p224 = por %p222, %p223
      %s225 = ssub.s32 %s23, %s30
      %p226 = scmp.eq.s32.totalorder %s225, 0
      %s228 = sadd.s32 %s227, 1
      %s229 = scalar_select %p226, %s227, %s228
      %p232 = pneg %p226
      %p233 = scmp.eq.s32.totalorder %s23, 1
      %p234 = por %p232, %p233
      %p235 = scmp.ne.s32.totalorder %s227, %s230
      %p236 = scmp.eq.s32.totalorder %s23, 0
      %p237 = por %p235, %p236
      %p238 = scmp.ne.s32.totalorder %s227, %s230
      %p239 = scmp.eq.s32.totalorder %s28, 1
      %p240 = por %p238, %p239
      %p241 = scmp.ne.s32.totalorder %s230, %s231
      %p242 = scmp.eq.s32.totalorder %s28, 0
      %p243 = por %p241, %p242
      %p244 = scmp.ne.s32.totalorder %s230, %s231
      %p245 = scmp.eq.s32.totalorder %s29, 1
      %p246 = por %p244, %p245
      %p248 = scmp.ne.s32.totalorder %s231, %s247
      %p249 = scmp.eq.s32.totalorder %s29, 0
      %p250 = por %p248, %p249
      %p251 = scmp.le.s32.totalorder 1, %s23
      %p252 = scmp.lt.s32.totalorder %s23, 3
      %p253 = pnand %p251, %p252
      %p254 = pneg %p253
      // Predicated region
      $region9: #{tpu_custom_call.1} parent=5 // pred_check
        _
      $region10: #{tpu_custom_call.1} parent=5 // pred_check_branch
        %256 = sbr.rel (%p253) target = $region12
      $region11: #{tpu_custom_call.1} parent=5 // pred_region
        %s257 = ssub.s32 %s23, 1
        // Predicated region
        $region13: #{tpu_custom_call.1} parent=11 // pred_check
          %p258 = pneg %p70
        $region14: #{tpu_custom_call.1} parent=11 // pred_check_branch
          %260 = sbr.rel (%p258) target = $region16
        $region15: #{tpu_custom_call.1} parent=11 // pred_region
          %s262 = ssub.s32 512, 512
          %263 = vsyncadd [#allocation6], %s262
          %s264 = sshll.u32 [#allocation5], 4
          %s265 = int_to_ptr.vmem [resolvable:$true] %s264
          %270 = dma.hbm_to_vmem [thread:$0]  %s1, 512, %s265, [#allocation6], 128, 128, 8
        $region16: #{tpu_custom_call.1} parent=11 // pred_fallthru
          _
        // Predicated region
        $region17: #{tpu_custom_call.1} parent=11 // pred_check
          %p271 = pneg %p91
        $region18: #{tpu_custom_call.1} parent=11 // pred_check_branch
          %273 = sbr.rel (%p271) target = $region20
        $region19: #{tpu_custom_call.1} parent=11 // pred_region
          _
        $region20: #{tpu_custom_call.1} parent=11 // pred_fallthru
          _
        // Predicated region
        $region21: #{tpu_custom_call.1} parent=11 // pred_check
          %p274 = pneg %p112
        $region22: #{tpu_custom_call.1} parent=11 // pred_check_branch
          %276 = sbr.rel (%p274) target = $region24
        $region23: #{tpu_custom_call.1} parent=11 // pred_region
          %s278 = ssub.s32 2048, 2048
          %279 = vsyncadd [#allocation6], %s278
          %s280 = sshll.u32 [#allocation7], 4
          %s281 = int_to_ptr.vmem [resolvable:$true] %s280
          %286 = dma.hbm_to_vmem [thread:$0]  %s3, 2048, %s281, [#allocation6], 128, 128, 8
        $region24: #{tpu_custom_call.1} parent=11 // pred_fallthru
          _
        // Predicated region
        $region25: #{tpu_custom_call.1} parent=11 // pred_check
          %p287 = pneg %p133
        $region26: #{tpu_custom_call.1} parent=11 // pred_check_branch
          %289 = sbr.rel (%p287) target = $region28
        $region27: #{tpu_custom_call.1} parent=11 // pred_region
          _
        $region28: #{tpu_custom_call.1} parent=11 // pred_fallthru
          _
        // Predicated region
        $region29: #{tpu_custom_call.1} parent=11 // pred_check
          %p290 = pneg %p154
        $region30: #{tpu_custom_call.1} parent=11 // pred_check_branch
          %292 = sbr.rel (%p290) target = $region32
        $region31: #{tpu_custom_call.1} parent=11 // pred_region
          %s294 = ssub.s32 2048, 2048
          %295 = vsyncadd [#allocation9], %s294
          %s296 = sshll.u32 [#allocation8], 4
          %s297 = int_to_ptr.vmem [resolvable:$true] %s296
          %302 = dma.hbm_to_vmem [thread:$0]  %s5, 2048, %s297, [#allocation9], 128, 128, 8
        $region32: #{tpu_custom_call.1} parent=11 // pred_fallthru
          _
        // Predicated region
        $region33: #{tpu_custom_call.1} parent=11 // pred_check
          %p303 = pneg %p175
        $region34: #{tpu_custom_call.1} parent=11 // pred_check_branch
          %305 = sbr.rel (%p303) target = $region36
        $region35: #{tpu_custom_call.1} parent=11 // pred_region
          _
        $region36: #{tpu_custom_call.1} parent=11 // pred_fallthru
          _
        // Predicated region
        $region37: #{tpu_custom_call.1} parent=11 // pred_check
          %p306 = pneg %p196
        $region38: #{tpu_custom_call.1} parent=11 // pred_check_branch
          %308 = sbr.rel (%p306) target = $region40
        $region39: #{tpu_custom_call.1} parent=11 // pred_region
          _
        $region40: #{tpu_custom_call.1} parent=11 // pred_fallthru
          _
        // Predicated region
        $region41: #{tpu_custom_call.1} parent=11 // pred_check
          %p309 = pneg %p217
        $region42: #{tpu_custom_call.1} parent=11 // pred_check_branch
          %311 = sbr.rel (%p309) target = $region44
        $region43: #{tpu_custom_call.1} parent=11 // pred_region
          _
        $region44: #{tpu_custom_call.1} parent=11 // pred_fallthru
          _
      $region12: #{tpu_custom_call.1} parent=5 // pred_fallthru
        _
      %p312 = scmp.lt.s32.totalorder %s23, 2
      // Predicated region
      $region45: #{tpu_custom_call.1} parent=5 // pred_check
        %p313 = pneg %p312
      $region46: #{tpu_custom_call.1} parent=5 // pred_check_branch
        %315 = sbr.rel (%p313) target = $region48
      $region47: #{tpu_custom_call.1} parent=5 // pred_region
        // Predicated region
        $region49: #{tpu_custom_call.1} parent=47 // pred_check
          %p316 = pneg %p43
        $region50: #{tpu_custom_call.1} parent=47 // pred_check_branch
          %318 = sbr.rel (%p316) target = $region52
        $region51: #{tpu_custom_call.1} parent=47 // pred_region
          %s319 = sand.u32 %s33, 1
          %s320 = scalar_lea.sflag [#allocation3], %s319
          %s321 = sand.u32 %s33, 1
          %s322 = smul.addr %s321, 8
          %s323 = scalar_lea.vmem [#allocation2], %s322
          %s325 = ssub.s32 128, 128
          %326 = vsyncadd %s320, %s325
          %s327 = smul.addr %s23, 128
          %s328 = scalar_lea.hbm %s0, %s327
          %s330 = sshll.u32 %s323, 4
          %s331 = int_to_ptr.vmem [resolvable:$true] %s330
          %333 = dma.hbm_to_vmem [thread:$0]  %s328, 128, %s331, %s320
        $region52: #{tpu_custom_call.1} parent=47 // pred_fallthru
          _
      $region48: #{tpu_custom_call.1} parent=5 // pred_fallthru
        _
      %p334 = scmp.le.s32.totalorder 1, %s23
      %p335 = scmp.lt.s32.totalorder %s23, 3
      %p336 = pnand %p334, %p335
      %p337 = pneg %p336
      // Predicated region
      $region53: #{tpu_custom_call.1} parent=5 // pred_check
        _
      $region54: #{tpu_custom_call.1} parent=5 // pred_check_branch
        %339 = sbr.rel (%p336) target = $region56
      $region55: #{tpu_custom_call.1} parent=5 // pred_region
        %s340 = ssub.s32 %s23, 1
        %s341 = sand.u32 %s36, 1
        %s342 = scalar_lea.sflag [#allocation3], %s341
        %s343 = sand.u32 %s36, 1
        %s344 = smul.addr %s343, 8
        %s345 = scalar_lea.vmem [#allocation2], %s344
        // Predicated region
        $region57: #{tpu_custom_call.1} parent=55 // pred_check
          %p346 = pneg %p49
        $region58: #{tpu_custom_call.1} parent=55 // pred_check_branch
          %348 = sbr.rel (%p346) target = $region60
        $region59: #{tpu_custom_call.1} parent=55 // pred_region
          %349 = dma.done %s342, 128
        $region60: #{tpu_custom_call.1} parent=55 // pred_fallthru
          _
        // Predicated region
        $region61: #{tpu_custom_call.1} parent=55 // pred_check
          %p350 = pneg %p70
        $region62: #{tpu_custom_call.1} parent=55 // pred_check_branch
          %352 = sbr.rel (%p350) target = $region64
        $region63: #{tpu_custom_call.1} parent=55 // pred_region
          %353 = dma.done [#allocation6], 512
        $region64: #{tpu_custom_call.1} parent=55 // pred_fallthru
          _
        // Predicated region
        $region65: #{tpu_custom_call.1} parent=55 // pred_check
          %p354 = pneg %p112
        $region66: #{tpu_custom_call.1} parent=55 // pred_check_branch
          %356 = sbr.rel (%p354) target = $region68
        $region67: #{tpu_custom_call.1} parent=55 // pred_region
          %357 = dma.done [#allocation6], 2048
        $region68: #{tpu_custom_call.1} parent=55 // pred_fallthru
          _
        // Predicated region
        $region69: #{tpu_custom_call.1} parent=55 // pred_check
          %p358 = pneg %p154
        $region70: #{tpu_custom_call.1} parent=55 // pred_check_branch
          %360 = sbr.rel (%p358) target = $region72
        $region71: #{tpu_custom_call.1} parent=55 // pred_region
          %361 = dma.done [#allocation9], 2048
        $region72: #{tpu_custom_call.1} parent=55 // pred_fallthru
          _
        %s362 = sand.u32 %s36, 1
        %s363 = scalar_lea.sflag [#allocation3], %s362
        %s364 = sand.u32 %s36, 1
        %s365 = smul.addr %s364, 8
        %s366 = scalar_lea.vmem [#allocation2], %s365
        %p367 = pneg %p49
        %p368 = pneg %p46
        %p369 = pneg %p70
        %p370 = pneg %p67
        %p371 = pneg %p91
        %p372 = pneg %p88
        %p373 = pneg %p112
        %p374 = pneg %p109
        %p375 = pneg %p133
        %p376 = pneg %p130
        %p377 = pneg %p154
        %p378 = pneg %p151
        %p379 = pneg %p175
        %p380 = pneg %p172
        %p381 = pneg %p196
        %p382 = pneg %p193
        %p383 = pneg %p217
        %p384 = pneg %p214
        %p385 = pneg %p243
        %p386 = pneg %p240
        %s387 = sand.u32 %s230, 1
        %s388 = scalar_lea.sflag [#allocation4], %s387
        %s389 = sand.u32 %s230, 1
        %s390 = smul.addr %s389, 8
        %s391 = scalar_lea.vmem [#allocation10], %s390
        %v392 = vld [vmem:[%s345] sm:$0xff]
        %v393 = vld [vmem:[#allocation5] sm:$0xff]
        %v394 = vld [vmem:[#allocation5 + $0x8] sm:$0xff]
        %v395 = vld [vmem:[#allocation5 + $0x10] sm:$0xff]
        %v396 = vld [vmem:[#allocation5 + $0x18] sm:$0xff]
        %v397 = vld [vmem:[%s2] sm:$0x1]
        %v399 = vlaneseq
        %v400 = vshrl.u32 %v399, 7
        %v401 = vsub.s32 0, %v400
        %v402 = vrot.slane %v397, %v401
        %vm404 = vcmask 261120
        %v406 = vsel %vm404, %v392, 0
        %408 = vmatprep.subr.mxu0 0.0
        %409 = vmatpush1.msra.mxu0 0.0
        %410 = vmatprep.subr.mxu0 0.0
        %411 = vmatpush1.msra.mxu0 0.0
        %412 = vmatprep.subr.mxu0 0.0
        %413 = vmatpush1.msra.mxu0 0.0
        %414 = vmatprep.subr.mxu0 0.0
        %415 = vmatpush1.msra.mxu0 0.0
        %416 = vmatprep.subr.mxu0 0.0
        %417 = vmatpush1.msra.mxu0 0.0
        %418 = vmatprep.subr.mxu0 0.0
        %419 = vmatpush1.msra.mxu0 0.0
        %420 = vmatprep.subr.mxu0 0.0
        %421 = vmatpush1.msra.mxu0 0.0
        %422 = vmatprep.subr.mxu0 0.0
        %423 = vmatpush1.msra.mxu0 0.0
        %424 = vmatprep.subr.mxu0 0.0
        %425 = vmatpush1.msra.mxu0 0.0
        %426 = vmatprep.subr.mxu0 0.0
        %427 = vmatpush1.msra.mxu0 0.0
        %428 = vmatprep.subr.mxu0 0.0
        %429 = vmatpush1.msra.mxu0 0.0
        %430 = vmatprep.subr.mxu0 0.0
        %431 = vmatpush1.msra.mxu0 0.0
        %432 = vmatprep.subr.mxu0 0.0
        %433 = vmatpush1.msra.mxu0 %v396
        %434 = vmatprep.subr.mxu0 0.0
        %435 = vmatpush1.msra.mxu0 %v395
        %436 = vmatprep.subr.mxu0 0.0
        %437 = vmatpush1.msra.mxu0 %v394
        %438 = vmatprep.subr.mxu0 0.0
        %439 = vmatpush1.msra.mxu0 %v393
        %440 = vmatprep.subr.mxu0 0.0
        %441 = vmatpush2.msra.mxu0 0.0
        %442 = vmatprep.subr.mxu0 0.0
        %443 = vmatpush2.msra.mxu0 0.0
        %444 = vmatprep.subr.mxu0 0.0
        %445 = vmatpush2.msra.mxu0 0.0
        %446 = vmatprep.subr.mxu0 0.0
        %447 = vmatpush2.msra.mxu0 0.0
        %448 = vmatprep.subr.mxu0 0.0
        %449 = vmatpush2.msra.mxu0 0.0
        %450 = vmatprep.subr.mxu0 0.0
        %451 = vmatpush2.msra.mxu0 0.0
        %452 = vmatprep.subr.mxu0 0.0
        %453 = vmatpush2.msra.mxu0 0.0
        %454 = vmatprep.subr.mxu0 0.0
        %455 = vmatpush2.msra.mxu0 0.0
        %456 = vmatprep.subr.mxu0 0.0
        %457 = vmatpush2.msra.mxu0 0.0
        %458 = vmatprep.subr.mxu0 0.0
        %459 = vmatpush2.msra.mxu0 0.0
        %460 = vmatprep.subr.mxu0 0.0
        %461 = vmatpush2.msra.mxu0 0.0
        %462 = vmatprep.subr.mxu0 0.0
        %463 = vmatpush2.msra.mxu0 0.0
        %464 = vmatprep.subr.mxu0 0.0
        %465 = vmatpush2.msra.mxu0 0.0
        %466 = vmatprep.subr.mxu0 0.0
        %467 = vmatpush2.msra.mxu0 0.0
        %468 = vmatprep.subr.mxu0 0.0
        %469 = vmatpush2.msra.mxu0 0.0
        %470 = vmatprep.subr.mxu0 0.0
        %471 = vmatpush2.msra.mxu0 0.0
        %472 = vmatprep.mubr.f32.mxu0 0.0
        %473 = vmatmul.mubr.f32.gmra.mxu0 %v406
        %v474 = vpop.f32.mrf.mxu0
        %v475 = vadd.f32 %v402, %v474
        %v476 = vpop.f32.mrf.mxu0
        %477 = vdwg.mxu0
        %v478 = vmax.f32 %v475, 0.0
        %v479 = vld [vmem:[#allocation7] sm:$0xff]
        %v480 = vld [vmem:[#allocation7 + $0x8] sm:$0xff]
        %v481 = vld [vmem:[#allocation7 + $0x10] sm:$0xff]
        %v482 = vld [vmem:[#allocation7 + $0x18] sm:$0xff]
        %v483 = vld [vmem:[#allocation7 + $0x20] sm:$0xff]
        %v484 = vld [vmem:[#allocation7 + $0x28] sm:$0xff]
        %v485 = vld [vmem:[#allocation7 + $0x30] sm:$0xff]
        %v486 = vld [vmem:[#allocation7 + $0x38] sm:$0xff]
        %v487 = vld [vmem:[#allocation7 + $0x40] sm:$0xff]
        %v488 = vld [vmem:[#allocation7 + $0x48] sm:$0xff]
        %v489 = vld [vmem:[#allocation7 + $0x50] sm:$0xff]
        %v490 = vld [vmem:[#allocation7 + $0x58] sm:$0xff]
        %v491 = vld [vmem:[#allocation7 + $0x60] sm:$0xff]
        %v492 = vld [vmem:[#allocation7 + $0x68] sm:$0xff]
        %v493 = vld [vmem:[#allocation7 + $0x70] sm:$0xff]
        %v494 = vld [vmem:[#allocation7 + $0x78] sm:$0xff]
        %v495 = vld [vmem:[%s4] sm:$0x1]
        %v497 = vlaneseq
        %v498 = vshrl.u32 %v497, 7
        %v499 = vsub.s32 0, %v498
        %v500 = vrot.slane %v495, %v499
        %502 = vmatprep.subr.mxu0 0.0
        %503 = vmatpush1.msra.mxu0 %v494
        %504 = vmatprep.subr.mxu0 0.0
        %505 = vmatpush1.msra.mxu0 %v493
        %506 = vmatprep.subr.mxu0 0.0
        %507 = vmatpush1.msra.mxu0 %v492
        %508 = vmatprep.subr.mxu0 0.0
        %509 = vmatpush1.msra.mxu0 %v491
        %510 = vmatprep.subr.mxu0 0.0
        %511 = vmatpush1.msra.mxu0 %v490
        %512 = vmatprep.subr.mxu0 0.0
        %513 = vmatpush1.msra.mxu0 %v489
        %514 = vmatprep.subr.mxu0 0.0
        %515 = vmatpush1.msra.mxu0 %v488
        %516 = vmatprep.subr.mxu0 0.0
        %517 = vmatpush1.msra.mxu0 %v487
        %518 = vmatprep.subr.mxu0 0.0
        %519 = vmatpush1.msra.mxu0 %v486
        %520 = vmatprep.subr.mxu0 0.0
        %521 = vmatpush1.msra.mxu0 %v485
        %522 = vmatprep.subr.mxu0 0.0
        %523 = vmatpush1.msra.mxu0 %v484
        %524 = vmatprep.subr.mxu0 0.0
        %525 = vmatpush1.msra.mxu0 %v483
        %526 = vmatprep.subr.mxu0 0.0
        %527 = vmatpush1.msra.mxu0 %v482
        %528 = vmatprep.subr.mxu0 0.0
        %529 = vmatpush1.msra.mxu0 %v481
        %530 = vmatprep.subr.mxu0 0.0
        %531 = vmatpush1.msra.mxu0 %v480
        %532 = vmatprep.subr.mxu0 0.0
        %533 = vmatpush1.msra.mxu0 %v479
        %534 = vmatprep.subr.mxu0 0.0
        %535 = vmatpush2.msra.mxu0 0.0
        %536 = vmatprep.subr.mxu0 0.0
        %537 = vmatpush2.msra.mxu0 0.0
        %538 = vmatprep.subr.mxu0 0.0
        %539 = vmatpush2.msra.mxu0 0.0
        %540 = vmatprep.subr.mxu0 0.0
        %541 = vmatpush2.msra.mxu0 0.0
        %542 = vmatprep.subr.mxu0 0.0
        %543 = vmatpush2.msra.mxu0 0.0
        %544 = vmatprep.subr.mxu0 0.0
        %545 = vmatpush2.msra.mxu0 0.0
        %546 = vmatprep.subr.mxu0 0.0
        %547 = vmatpush2.msra.mxu0 0.0
        %548 = vmatprep.subr.mxu0 0.0
        %549 = vmatpush2.msra.mxu0 0.0
        %550 = vmatprep.subr.mxu0 0.0
        %551 = vmatpush2.msra.mxu0 0.0
        %552 = vmatprep.subr.mxu0 0.0
        %553 = vmatpush2.msra.mxu0 0.0
        %554 = vmatprep.subr.mxu0 0.0
        %555 = vmatpush2.msra.mxu0 0.0
        %556 = vmatprep.subr.mxu0 0.0
        %557 = vmatpush2.msra.mxu0 0.0
        %558 = vmatprep.subr.mxu0 0.0
        %559 = vmatpush2.msra.mxu0 0.0
        %560 = vmatprep.subr.mxu0 0.0
        %561 = vmatpush2.msra.mxu0 0.0
        %562 = vmatprep.subr.mxu0 0.0
        %563 = vmatpush2.msra.mxu0 0.0
        %564 = vmatprep.subr.mxu0 0.0
        %565 = vmatpush2.msra.mxu0 0.0
        %566 = vmatprep.mubr.f32.mxu0 0.0
        %567 = vmatmul.mubr.f32.gmra.mxu0 %v478
        %v568 = vpop.f32.mrf.mxu0
        %v569 = vadd.f32 %v500, %v568
        %v570 = vpop.f32.mrf.mxu0
        %571 = vdwg.mxu0
        %v572 = vmax.f32 %v569, 0.0
        %v573 = vld [vmem:[#allocation8] sm:$0xff]
        %v574 = vld [vmem:[#allocation8 + $0x8] sm:$0xff]
        %v575 = vld [vmem:[#allocation8 + $0x10] sm:$0xff]
        %v576 = vld [vmem:[#allocation8 + $0x18] sm:$0xff]
        %v577 = vld [vmem:[#allocation8 + $0x20] sm:$0xff]
        %v578 = vld [vmem:[#allocation8 + $0x28] sm:$0xff]
        %v579 = vld [vmem:[#allocation8 + $0x30] sm:$0xff]
        %v580 = vld [vmem:[#allocation8 + $0x38] sm:$0xff]
        %v581 = vld [vmem:[#allocation8 + $0x40] sm:$0xff]
        %v582 = vld [vmem:[#allocation8 + $0x48] sm:$0xff]
        %v583 = vld [vmem:[#allocation8 + $0x50] sm:$0xff]
        %v584 = vld [vmem:[#allocation8 + $0x58] sm:$0xff]
        %v585 = vld [vmem:[#allocation8 + $0x60] sm:$0xff]
        %v586 = vld [vmem:[#allocation8 + $0x68] sm:$0xff]
        %v587 = vld [vmem:[#allocation8 + $0x70] sm:$0xff]
        %v588 = vld [vmem:[#allocation8 + $0x78] sm:$0xff]
        %v589 = vld [vmem:[%s6] sm:$0x1]
        %v591 = vlaneseq
        %v592 = vshrl.u32 %v591, 7
        %v593 = vsub.s32 0, %v592
        %v594 = vrot.slane %v589, %v593
        %596 = vmatprep.subr.mxu0 0.0
        %597 = vmatpush1.msra.mxu0 %v588
        %598 = vmatprep.subr.mxu0 0.0
        %599 = vmatpush1.msra.mxu0 %v587
        %600 = vmatprep.subr.mxu0 0.0
        %601 = vmatpush1.msra.mxu0 %v586
        %602 = vmatprep.subr.mxu0 0.0
        %603 = vmatpush1.msra.mxu0 %v585
        %604 = vmatprep.subr.mxu0 0.0
        %605 = vmatpush1.msra.mxu0 %v584
        %606 = vmatprep.subr.mxu0 0.0
        %607 = vmatpush1.msra.mxu0 %v583
        %608 = vmatprep.subr.mxu0 0.0
        %609 = vmatpush1.msra.mxu0 %v582
        %610 = vmatprep.subr.mxu0 0.0
        %611 = vmatpush1.msra.mxu0 %v581
        %612 = vmatprep.subr.mxu0 0.0
        %613 = vmatpush1.msra.mxu0 %v580
        %614 = vmatprep.subr.mxu0 0.0
        %615 = vmatpush1.msra.mxu0 %v579
        %616 = vmatprep.subr.mxu0 0.0
        %617 = vmatpush1.msra.mxu0 %v578
        %618 = vmatprep.subr.mxu0 0.0
        %619 = vmatpush1.msra.mxu0 %v577
        %620 = vmatprep.subr.mxu0 0.0
        %621 = vmatpush1.msra.mxu0 %v576
        %622 = vmatprep.subr.mxu0 0.0
        %623 = vmatpush1.msra.mxu0 %v575
        %624 = vmatprep.subr.mxu0 0.0
        %625 = vmatpush1.msra.mxu0 %v574
        %626 = vmatprep.subr.mxu0 0.0
        %627 = vmatpush1.msra.mxu0 %v573
        %628 = vmatprep.subr.mxu0 0.0
        %629 = vmatpush2.msra.mxu0 0.0
        %630 = vmatprep.subr.mxu0 0.0
        %631 = vmatpush2.msra.mxu0 0.0
        %632 = vmatprep.subr.mxu0 0.0
        %633 = vmatpush2.msra.mxu0 0.0
        %634 = vmatprep.subr.mxu0 0.0
        %635 = vmatpush2.msra.mxu0 0.0
        %636 = vmatprep.subr.mxu0 0.0
        %637 = vmatpush2.msra.mxu0 0.0
        %638 = vmatprep.subr.mxu0 0.0
        %639 = vmatpush2.msra.mxu0 0.0
        %640 = vmatprep.subr.mxu0 0.0
        %641 = vmatpush2.msra.mxu0 0.0
        %642 = vmatprep.subr.mxu0 0.0
        %643 = vmatpush2.msra.mxu0 0.0
        %644 = vmatprep.subr.mxu0 0.0
        %645 = vmatpush2.msra.mxu0 0.0
        %646 = vmatprep.subr.mxu0 0.0
        %647 = vmatpush2.msra.mxu0 0.0
        %648 = vmatprep.subr.mxu0 0.0
        %649 = vmatpush2.msra.mxu0 0.0
        %650 = vmatprep.subr.mxu0 0.0
        %651 = vmatpush2.msra.mxu0 0.0
        %652 = vmatprep.subr.mxu0 0.0
        %653 = vmatpush2.msra.mxu0 0.0
        %654 = vmatprep.subr.mxu0 0.0
        %655 = vmatpush2.msra.mxu0 0.0
        %656 = vmatprep.subr.mxu0 0.0
        %657 = vmatpush2.msra.mxu0 0.0
        %658 = vmatprep.subr.mxu0 0.0
        %659 = vmatpush2.msra.mxu0 0.0
        %660 = vmatprep.mubr.f32.mxu0 0.0
        %661 = vmatmul.mubr.f32.gmra.mxu0 %v572
        %v662 = vpop.f32.mrf.mxu0
        %v663 = vadd.f32 %v594, %v662
        %v664 = vpop.f32.mrf.mxu0
        %665 = vdwg.mxu0
        %v666 = vld [vmem:[%s7] sm:$0x1]
        %v667 = vld [vmem:[%s8] sm:$0x1]
        %668 = vadd.xlane.f32.xlu0 %v663
        %v669 = vpop.xlane.xlu0 %668
        %v670 = vmul.f32 %v669, 0.03125
        %v671 = vsub.f32 %v663, %v670
        %v672 = vlaneseq
        %v673 = vand.u32 %v672, 127
        %vm674 = vcmp.lt.s32.totalorder %v673, 32
        %v675 = vsel %vm674, %v671, 0.0
        %v676 = vmul.f32 %v675, %v675
        %677 = vadd.xlane.f32.xlu0 %v676
        %v678 = vpop.xlane.xlu0 %677
        %v679 = vmul.f32 %v678, 0.03125
        %v680 = vadd.f32 %v679, 1e-05
        %v681 = vrsqrt.pop %v680
        %v682 = vmul.f32 %v675, %v681
        %v684 = vlaneseq
        %v685 = vshrl.u32 %v684, 7
        %v686 = vsub.s32 0, %v685
        %v687 = vrot.slane %v666, %v686
        %v689 = vmul.f32 %v682, %v687
        %v691 = vlaneseq
        %v692 = vshrl.u32 %v691, 7
        %v693 = vsub.s32 0, %v692
        %v694 = vrot.slane %v667, %v693
        %v696 = vadd.f32 %v689, %v694
        %697 = vst [vmem:[%s391] sm:$0xff] %v696
        %s698 = sand.u32 %s230, 1
        %s699 = scalar_lea.sflag [#allocation4], %s698
        %s700 = sand.u32 %s230, 1
        %s701 = smul.addr %s700, 8
        %s702 = scalar_lea.vmem [#allocation10], %s701
        // Predicated region
        $region73: #{tpu_custom_call.1} parent=55 // pred_check
          %p703 = pneg %p240
        $region74: #{tpu_custom_call.1} parent=55 // pred_check_branch
          %705 = sbr.rel (%p703) target = $region76
        $region75: #{tpu_custom_call.1} parent=55 // pred_region
          %s707 = ssub.s32 128, 128
          %708 = vsyncadd %s699, %s707
          %s709 = smul.addr %s28, 128
          %s710 = scalar_lea.hbm %s9, %s709
          %s712 = sshll.u32 %s702, 4
          %s713 = int_to_ptr.vmem [resolvable:$true] %s712
          %715 = dma.vmem_to_hbm [thread:$0]  %s713, 128, %s710, %s699
        $region76: #{tpu_custom_call.1} parent=55 // pred_fallthru
          _
      $region56: #{tpu_custom_call.1} parent=5 // pred_fallthru
        _
      %p716 = scmp.le.s32.totalorder 2, %s23
      // Predicated region
      $region77: #{tpu_custom_call.1} parent=5 // pred_check
        %p717 = pneg %p716
      $region78: #{tpu_custom_call.1} parent=5 // pred_check_branch
        %719 = sbr.rel (%p717) target = $region80
      $region79: #{tpu_custom_call.1} parent=5 // pred_region
        %s720 = ssub.s32 %s23, 2
        // Predicated region
        $region81: #{tpu_custom_call.1} parent=79 // pred_check
          %p721 = pneg %p246
        $region82: #{tpu_custom_call.1} parent=79 // pred_check_branch
          %723 = sbr.rel (%p721) target = $region84
        $region83: #{tpu_custom_call.1} parent=79 // pred_region
          %s724 = sand.u32 %s231, 1
          %s725 = scalar_lea.sflag [#allocation4], %s724
          %s726 = sand.u32 %s231, 1
          %s727 = smul.addr %s726, 8
          %s728 = scalar_lea.vmem [#allocation10], %s727
          %729 = dma.done %s725, 128
        $region84: #{tpu_custom_call.1} parent=79 // pred_fallthru
          _
      $region80: #{tpu_custom_call.1} parent=5 // pred_fallthru
        _
    $region6: #{tpu_custom_call.1} parent=1 // loop_footer
      %s27 = sadd.s32 1, %s23
    $region7: #{tpu_custom_call.1} parent=1 // loop_footer_branch
      %22 = sbr.rel target = $region3
    $region8: #{tpu_custom_call.1} parent=1 // loop_exit
      _
    %730 = vsyncpa [#allocation3], 1
    %s731 = scalar_lea.sflag [#allocation3], 1
    %732 = vsyncpa %s731, 1
    %733 = vsyncpa [#allocation6], 1
    %734 = vsyncpa [#allocation9], 1
    %735 = vsyncpa [#allocation4], 1
    %s736 = scalar_lea.sflag [#allocation4], 1
    %737 = vsyncpa %s736, 1

// kernel: tpu_custom_call.1
$region0: #{tpu_custom_call.1}
  #allocation0 [shape = 'u32[]', space=smem, size = 0x4, offset = 0x4, fixed_abs, tag = 'smem constant byte address 0x4 - core index']
  #allocation1 [shape = 'u32[144,128]{1,0:T(1,128)}', space=vmem, size = 0x12000, scoped, tag = 'internal scratch']
  %s0 = inlined_call_operand.hbm [shape: f32[16,32], index: 0, kind: input, shape index: {}]
  %s1 = inlined_call_operand.hbm [shape: f32[32,128], index: 1, kind: input, shape index: {}]
  %s2 = inlined_call_operand.vmem [shape: f32[1,128], index: 2, kind: input, shape index: {}]
  %s3 = inlined_call_operand.hbm [shape: f32[128,128], index: 3, kind: input, shape index: {}]
  %s4 = inlined_call_operand.vmem [shape: f32[1,128], index: 4, kind: input, shape index: {}]
  %s5 = inlined_call_operand.hbm [shape: f32[128,128], index: 5, kind: input, shape index: {}]
  %s6 = inlined_call_operand.vmem [shape: f32[1,128], index: 6, kind: input, shape index: {}]
  %s7 = inlined_call_operand.vmem [shape: f32[1,128], index: 7, kind: input, shape index: {}]
  %s8 = inlined_call_operand.vmem [shape: f32[1,128], index: 8, kind: input, shape index: {}]
  %s9 = inlined_call_operand.hbm [shape: f32[16,128], index: 9, kind: output, shape index: {}]
  %s10 = sld [smem:[#allocation0]]
  $region85: #{tpu_custom_call.1} parent=0
    _
  %s12 = ssub.s32 1, %s10
  %s13 = scalar_select 0, %s12, %s10
  $region1: #{tpu_custom_call.1} parent=0
    #allocation2 [shape = 'u8[8192]{0}', space=vmem, size = 0x2000, scoped, tag = 'input window, operand 0']
    #allocation3 [shape = 's32[2]{0}', space=sflag, size = 0x8, scoped, tag = 'scoped memory for tpu_custom_call.1']
    #allocation4 [shape = 's32[2]{0}', space=sflag, size = 0x8, scoped, tag = 'scoped memory for tpu_custom_call.1']
    #allocation5 [shape = 'u8[16384]{0}', space=vmem, size = 0x4000, scoped, tag = 'input window, operand 1, single buffered']
    #allocation6 [shape = 's32[1]{0}', space=sflag, size = 0x4, scoped, tag = 'scoped memory for tpu_custom_call.1']
    #allocation7 [shape = 'u8[65536]{0}', space=vmem, size = 0x10000, scoped, tag = 'input window, operand 3, single buffered']
    #allocation8 [shape = 'u8[65536]{0}', space=vmem, size = 0x10000, scoped, tag = 'input window, operand 5, single buffered']
    #allocation9 [shape = 's32[1]{0}', space=sflag, size = 0x4, scoped, tag = 'scoped memory for tpu_custom_call.1']
    #allocation10 [shape = 'u8[8192]{0}', space=vmem, size = 0x2000, scoped, tag = 'output window, operand 0']
    %14 = vsyncpa [#allocation3], 0
    %s15 = scalar_lea.sflag [#allocation3], 1
    %16 = vsyncpa %s15, 0
    %17 = vsyncpa [#allocation6], 0
    %18 = vsyncpa [#allocation9], 0
    %19 = vsyncpa [#allocation4], 0
    %s20 = scalar_lea.sflag [#allocation4], 1
    %21 = vsyncpa %s20, 0
    loop: start=0, step=1, limit=4
    $region2: #{tpu_custom_call.1} parent=1 // loop_pre_header
      _
    $region3: #{tpu_custom_call.1} parent=1 // loop_header
      %s23 = sphi 0, %s27
      %p24 = scmp.ge.s32.totalorder %s23, 4
      %s33 = sphi 0, %s35
      %s36 = sphi 0, %s33
      %s37 = sphi 0, %s36
      %s53 = sphi 0, %s37
      %s57 = sphi 0, %s57
      %s59 = sphi 0, %s57
      %s60 = sphi 0, %s59
      %s74 = sphi 0, %s60
      %s78 = sphi 0, %s78
      %s80 = sphi 0, %s78
      %s81 = sphi 0, %s80
      %s95 = sphi 0, %s81
      %s99 = sphi 0, %s99
      %s101 = sphi 0, %s99
      %s102 = sphi 0, %s101
      %s116 = sphi 0, %s102
      %s120 = sphi 0, %s120
      %s122 = sphi 0, %s120
      %s123 = sphi 0, %s122
      %s137 = sphi 0, %s123
      %s141 = sphi 0, %s141
      %s143 = sphi 0, %s141
      %s144 = sphi 0, %s143
      %s158 = sphi 0, %s144
      %s162 = sphi 0, %s162
      %s164 = sphi 0, %s162
      %s165 = sphi 0, %s164
      %s179 = sphi 0, %s165
      %s183 = sphi 0, %s183
      %s185 = sphi 0, %s183
      %s186 = sphi 0, %s185
      %s200 = sphi 0, %s186
      %s204 = sphi 0, %s204
      %s206 = sphi 0, %s204
      %s207 = sphi 0, %s206
      %s221 = sphi 0, %s207
      %s227 = sphi 0, %s229
      %s230 = sphi 0, %s227
      %s231 = sphi 0, %s230
      %s247 = sphi 0, %s231
    $region4: #{tpu_custom_call.1} parent=1 // loop_header_branch
      %26 = sbr.rel (%p24) target = $region8
    $region5: #{tpu_custom_call.1} parent=1 // loop_body
      %s28 = ssub.s32 %s23, 1
      %s29 = ssub.s32 %s23, 2
      %s30 = sadd.s32 %s23, 1
      %s31 = ssub.s32 %s23, %s30
      %p32 = scmp.eq.s32.totalorder %s31, 0
      %s34 = sadd.s32 %s33, 1
      %s35 = scalar_select %p32, %s33, %s34
      %p38 = pneg %p32
      %p39 = scmp.eq.s32.totalorder %s23, 1
      %p40 = por %p38, %p39
      %p41 = scmp.ne.s32.totalorder %s33, %s36
      %p42 = scmp.eq.s32.totalorder %s23, 0
      %p43 = por %p41, %p42
      %p44 = scmp.ne.s32.totalorder %s33, %s36
      %p45 = scmp.eq.s32.totalorder %s28, 1
      %p46 = por %p44, %p45
      %p47 = scmp.ne.s32.totalorder %s36, %s37
      %p48 = scmp.eq.s32.totalorder %s28, 0
      %p49 = por %p47, %p48
      %p50 = scmp.ne.s32.totalorder %s36, %s37
      %p51 = scmp.eq.s32.totalorder %s29, 1
      %p52 = por %p50, %p51
      %p54 = scmp.ne.s32.totalorder %s37, %s53
      %p55 = scmp.eq.s32.totalorder %s29, 0
      %p56 = por %p54, %p55
      %s58 = sadd.s32 %s57, 1
      %p61 = scmp.eq.s32.totalorder %s23, 1
      %p62 = scmp.ne.s32.totalorder %s57, %s59
      %p63 = scmp.eq.s32.totalorder %s23, 0
      %p64 = por %p62, %p63
      %p65 = scmp.ne.s32.totalorder %s57, %s59
      %p66 = scmp.eq.s32.totalorder %s28, 1
      %p67 = por %p65, %p66
      %p68 = scmp.ne.s32.totalorder %s59, %s60
      %p69 = scmp.eq.s32.totalorder %s28, 0
      %p70 = por %p68, %p69
      %p71 = scmp.ne.s32.totalorder %s59, %s60
      %p72 = scmp.eq.s32.totalorder %s29, 1
      %p73 = por %p71, %p72
      %p75 = scmp.ne.s32.totalorder %s60, %s74
      %p76 = scmp.eq.s32.totalorder %s29, 0
      %p77 = por %p75, %p76
      %s79 = sadd.s32 %s78, 1
      %p82 = scmp.eq.s32.totalorder %s23, 1
      %p83 = scmp.ne.s32.totalorder %s78, %s80
      %p84 = scmp.eq.s32.totalorder %s23, 0
      %p85 = por %p83, %p84
      %p86 = scmp.ne.s32.totalorder %s78, %s80
      %p87 = scmp.eq.s32.totalorder %s28, 1
      %p88 = por %p86, %p87
      %p89 = scmp.ne.s32.totalorder %s80, %s81
      %p90 = scmp.eq.s32.totalorder %s28, 0
      %p91 = por %p89, %p90
      %p92 = scmp.ne.s32.totalorder %s80, %s81
      %p93 = scmp.eq.s32.totalorder %s29, 1
      %p94 = por %p92, %p93
      %p96 = scmp.ne.s32.totalorder %s81, %s95
      %p97 = scmp.eq.s32.totalorder %s29, 0
      %p98 = por %p96, %p97
      %s100 = sadd.s32 %s99, 1
      %p103 = scmp.eq.s32.totalorder %s23, 1
      %p104 = scmp.ne.s32.totalorder %s99, %s101
      %p105 = scmp.eq.s32.totalorder %s23, 0
      %p106 = por %p104, %p105
      %p107 = scmp.ne.s32.totalorder %s99, %s101
      %p108 = scmp.eq.s32.totalorder %s28, 1
      %p109 = por %p107, %p108
      %p110 = scmp.ne.s32.totalorder %s101, %s102
      %p111 = scmp.eq.s32.totalorder %s28, 0
      %p112 = por %p110, %p111
      %p113 = scmp.ne.s32.totalorder %s101, %s102
      %p114 = scmp.eq.s32.totalorder %s29, 1
      %p115 = por %p113, %p114
      %p117 = scmp.ne.s32.totalorder %s102, %s116
      %p118 = scmp.eq.s32.totalorder %s29, 0
      %p119 = por %p117, %p118
      %s121 = sadd.s32 %s120, 1
      %p124 = scmp.eq.s32.totalorder %s23, 1
      %p125 = scmp.ne.s32.totalorder %s120, %s122
      %p126 = scmp.eq.s32.totalorder %s23, 0
      %p127 = por %p125, %p126
      %p128 = scmp.ne.s32.totalorder %s120, %s122
      %p129 = scmp.eq.s32.totalorder %s28, 1
      %p130 = por %p128, %p129
      %p131 = scmp.ne.s32.totalorder %s122, %s123
      %p132 = scmp.eq.s32.totalorder %s28, 0
      %p133 = por %p131, %p132
      %p134 = scmp.ne.s32.totalorder %s122, %s123
      %p135 = scmp.eq.s32.totalorder %s29, 1
      %p136 = por %p134, %p135
      %p138 = scmp.ne.s32.totalorder %s123, %s137
      %p139 = scmp.eq.s32.totalorder %s29, 0
      %p140 = por %p138, %p139
      %s142 = sadd.s32 %s141, 1
      %p145 = scmp.eq.s32.totalorder %s23, 1
      %p146 = scmp.ne.s32.totalorder %s141, %s143
      %p147 = scmp.eq.s32.totalorder %s23, 0
      %p148 = por %p146, %p147
      %p149 = scmp.ne.s32.totalorder %s141, %s143
      %p150 = scmp.eq.s32.totalorder %s28, 1
      %p151 = por %p149, %p150
      %p152 = scmp.ne.s32.totalorder %s143, %s144
      %p153 = scmp.eq.s32.totalorder %s28, 0
      %p154 = por %p152, %p153
      %p155 = scmp.ne.s32.totalorder %s143, %s144
      %p156 = scmp.eq.s32.totalorder %s29, 1
      %p157 = por %p155, %p156
      %p159 = scmp.ne.s32.totalorder %s144, %s158
      %p160 = scmp.eq.s32.totalorder %s29, 0
      %p161 = por %p159, %p160
      %s163 = sadd.s32 %s162, 1
      %p166 = scmp.eq.s32.totalorder %s23, 1
      %p167 = scmp.ne.s32.totalorder %s162, %s164
      %p168 = scmp.eq.s32.totalorder %s23, 0
      %p169 = por %p167, %p168
      %p170 = scmp.ne.s32.totalorder %s162, %s164
      %p171 = scmp.eq.s32.totalorder %s28, 1
      %p172 = por %p170, %p171
      %p173 = scmp.ne.s32.totalorder %s164, %s165
      %p174 = scmp.eq.s32.totalorder %s28, 0
      %p175 = por %p173, %p174
      %p176 = scmp.ne.s32.totalorder %s164, %s165
      %p177 = scmp.eq.s32.totalorder %s29, 1
      %p178 = por %p176, %p177
      %p180 = scmp.ne.s32.totalorder %s165, %s179
      %p181 = scmp.eq.s32.totalorder %s29, 0
      %p182 = por %p180, %p181
      %s184 = sadd.s32 %s183, 1
      %p187 = scmp.eq.s32.totalorder %s23, 1
      %p188 = scmp.ne.s32.totalorder %s183, %s185
      %p189 = scmp.eq.s32.totalorder %s23, 0
      %p190 = por %p188, %p189
      %p191 = scmp.ne.s32.totalorder %s183, %s185
      %p192 = scmp.eq.s32.totalorder %s28, 1
      %p193 = por %p191, %p192
      %p194 = scmp.ne.s32.totalorder %s185, %s186
      %p195 = scmp.eq.s32.totalorder %s28, 0
      %p196 = por %p194, %p195
      %p197 = scmp.ne.s32.totalorder %s185, %s186
      %p198 = scmp.eq.s32.totalorder %s29, 1
      %p199 = por %p197, %p198
      %p201 = scmp.ne.s32.totalorder %s186, %s200
      %p202 = scmp.eq.s32.totalorder %s29, 0
      %p203 = por %p201, %p202
      %s205 = sadd.s32 %s204, 1
      %p208 = scmp.eq.s32.totalorder %s23, 1
      %p209 = scmp.ne.s32.totalorder %s204, %s206
      %p210 = scmp.eq.s32.totalorder %s23, 0
      %p211 = por %p209, %p210
      %p212 = scmp.ne.s32.totalorder %s204, %s206
      %p213 = scmp.eq.s32.totalorder %s28, 1
      %p214 = por %p212, %p213
      %p215 = scmp.ne.s32.totalorder %s206, %s207
      %p216 = scmp.eq.s32.totalorder %s28, 0
      %p217 = por %p215, %p216
      %p218 = scmp.ne.s32.totalorder %s206, %s207
      %p219 = scmp.eq.s32.totalorder %s29, 1
      %p220 = por %p218, %p219
      %p222 = scmp.ne.s32.totalorder %s207, %s221
      %p223 = scmp.eq.s32.totalorder %s29, 0
      %p224 = por %p222, %p223
      %s225 = ssub.s32 %s23, %s30
      %p226 = scmp.eq.s32.totalorder %s225, 0
      %s228 = sadd.s32 %s227, 1
      %s229 = scalar_select %p226, %s227, %s228
      %p232 = pneg %p226
      %p233 = scmp.eq.s32.totalorder %s23, 1
      %p234 = por %p232, %p233
      %p235 = scmp.ne.s32.totalorder %s227, %s230
      %p236 = scmp.eq.s32.totalorder %s23, 0
      %p237 = por %p235, %p236
      %p238 = scmp.ne.s32.totalorder %s227, %s230
      %p239 = scmp.eq.s32.totalorder %s28, 1
      %p240 = por %p238, %p239
      %p241 = scmp.ne.s32.totalorder %s230, %s231
      %p242 = scmp.eq.s32.totalorder %s28, 0
      %p243 = por %p241, %p242
      %p244 = scmp.ne.s32.totalorder %s230, %s231
      %p245 = scmp.eq.s32.totalorder %s29, 1
      %p246 = por %p244, %p245
      %p248 = scmp.ne.s32.totalorder %s231, %s247
      %p249 = scmp.eq.s32.totalorder %s29, 0
      %p250 = por %p248, %p249
      %p251 = scmp.le.s32.totalorder 1, %s23
      %p252 = scmp.lt.s32.totalorder %s23, 3
      %p253 = pnand %p251, %p252
      %p254 = pneg %p253
      // Predicated region
      $region9: #{tpu_custom_call.1} parent=5 // pred_check
        _
      $region10: #{tpu_custom_call.1} parent=5 // pred_check_branch
        %256 = sbr.rel (%p253) target = $region12
      $region11: #{tpu_custom_call.1} parent=5 // pred_region
        %s257 = ssub.s32 %s23, 1
        // Predicated region
        $region13: #{tpu_custom_call.1} parent=11 // pred_check
          %p258 = pneg %p70
        $region14: #{tpu_custom_call.1} parent=11 // pred_check_branch
          %260 = sbr.rel (%p258) target = $region16
        $region15: #{tpu_custom_call.1} parent=11 // pred_region
          %s262 = ssub.s32 512, 512
          %263 = vsyncadd [#allocation6], %s262
          %s264 = sshll.u32 [#allocation5], 4
          %s265 = int_to_ptr.vmem [resolvable:$true] %s264
          %270 = dma.hbm_to_vmem [thread:$0]  %s1, 512, %s265, [#allocation6], 128, 128, 8
        $region16: #{tpu_custom_call.1} parent=11 // pred_fallthru
          _
        // Predicated region
        $region17: #{tpu_custom_call.1} parent=11 // pred_check
          %p271 = pneg %p91
        $region18: #{tpu_custom_call.1} parent=11 // pred_check_branch
          %273 = sbr.rel (%p271) target = $region20
        $region19: #{tpu_custom_call.1} parent=11 // pred_region
          _
        $region20: #{tpu_custom_call.1} parent=11 // pred_fallthru
          _
        // Predicated region
        $region21: #{tpu_custom_call.1} parent=11 // pred_check
          %p274 = pneg %p112
        $region22: #{tpu_custom_call.1} parent=11 // pred_check_branch
          %276 = sbr.rel (%p274) target = $region24
        $region23: #{tpu_custom_call.1} parent=11 // pred_region
          %s278 = ssub.s32 2048, 2048
          %279 = vsyncadd [#allocation6], %s278
          %s280 = sshll.u32 [#allocation7], 4
          %s281 = int_to_ptr.vmem [resolvable:$true] %s280
          %286 = dma.hbm_to_vmem [thread:$0]  %s3, 2048, %s281, [#allocation6], 128, 128, 8
        $region24: #{tpu_custom_call.1} parent=11 // pred_fallthru
          _
        // Predicated region
        $region25: #{tpu_custom_call.1} parent=11 // pred_check
          %p287 = pneg %p133
        $region26: #{tpu_custom_call.1} parent=11 // pred_check_branch
          %289 = sbr.rel (%p287) target = $region28
        $region27: #{tpu_custom_call.1} parent=11 // pred_region
          _
        $region28: #{tpu_custom_call.1} parent=11 // pred_fallthru
          _
        // Predicated region
        $region29: #{tpu_custom_call.1} parent=11 // pred_check
          %p290 = pneg %p154
        $region30: #{tpu_custom_call.1} parent=11 // pred_check_branch
          %292 = sbr.rel (%p290) target = $region32
        $region31: #{tpu_custom_call.1} parent=11 // pred_region
          %s294 = ssub.s32 2048, 2048
          %295 = vsyncadd [#allocation9], %s294
          %s296 = sshll.u32 [#allocation8], 4
          %s297 = int_to_ptr.vmem [resolvable:$true] %s296
          %302 = dma.hbm_to_vmem [thread:$0]  %s5, 2048, %s297, [#allocation9], 128, 128, 8
        $region32: #{tpu_custom_call.1} parent=11 // pred_fallthru
          _
        // Predicated region
        $region33: #{tpu_custom_call.1} parent=11 // pred_check
          %p303 = pneg %p175
        $region34: #{tpu_custom_call.1} parent=11 // pred_check_branch
          %305 = sbr.rel (%p303) target = $region36
        $region35: #{tpu_custom_call.1} parent=11 // pred_region
          _
        $region36: #{tpu_custom_call.1} parent=11 // pred_fallthru
          _
        // Predicated region
        $region37: #{tpu_custom_call.1} parent=11 // pred_check
          %p306 = pneg %p196
        $region38: #{tpu_custom_call.1} parent=11 // pred_check_branch
          %308 = sbr.rel (%p306) target = $region40
        $region39: #{tpu_custom_call.1} parent=11 // pred_region
          _
        $region40: #{tpu_custom_call.1} parent=11 // pred_fallthru
          _
        // Predicated region
        $region41: #{tpu_custom_call.1} parent=11 // pred_check
          %p309 = pneg %p217
        $region42: #{tpu_custom_call.1} parent=11 // pred_check_branch
          %311 = sbr.rel (%p309) target = $region44
        $region43: #{tpu_custom_call.1} parent=11 // pred_region
          _
        $region44: #{tpu_custom_call.1} parent=11 // pred_fallthru
          _
      $region12: #{tpu_custom_call.1} parent=5 // pred_fallthru
        _
      %p312 = scmp.lt.s32.totalorder %s23, 2
      // Predicated region
      $region45: #{tpu_custom_call.1} parent=5 // pred_check
        %p313 = pneg %p312
      $region46: #{tpu_custom_call.1} parent=5 // pred_check_branch
        %315 = sbr.rel (%p313) target = $region48
      $region47: #{tpu_custom_call.1} parent=5 // pred_region
        // Predicated region
        $region49: #{tpu_custom_call.1} parent=47 // pred_check
          %p316 = pneg %p43
        $region50: #{tpu_custom_call.1} parent=47 // pred_check_branch
          %318 = sbr.rel (%p316) target = $region52
        $region51: #{tpu_custom_call.1} parent=47 // pred_region
          %s319 = sand.u32 %s33, 1
          %s320 = scalar_lea.sflag [#allocation3], %s319
          %s321 = sand.u32 %s33, 1
          %s322 = smul.addr %s321, 8
          %s323 = scalar_lea.vmem [#allocation2], %s322
          %s325 = ssub.s32 128, 128
          %326 = vsyncadd %s320, %s325
          %s327 = smul.addr %s23, 128
          %s328 = scalar_lea.hbm %s0, %s327
          %s330 = sshll.u32 %s323, 4
          %s331 = int_to_ptr.vmem [resolvable:$true] %s330
          %333 = dma.hbm_to_vmem [thread:$0]  %s328, 128, %s331, %s320
        $region52: #{tpu_custom_call.1} parent=47 // pred_fallthru
          _
      $region48: #{tpu_custom_call.1} parent=5 // pred_fallthru
        _
      %p334 = scmp.le.s32.totalorder 1, %s23
      %p335 = scmp.lt.s32.totalorder %s23, 3
      %p336 = pnand %p334, %p335
      %p337 = pneg %p336
      // Predicated region
      $region53: #{tpu_custom_call.1} parent=5 // pred_check
        _
      $region54: #{tpu_custom_call.1} parent=5 // pred_check_branch
        %339 = sbr.rel (%p336) target = $region56
      $region55: #{tpu_custom_call.1} parent=5 // pred_region
        %s340 = ssub.s32 %s23, 1
        %s341 = sand.u32 %s36, 1
        %s342 = scalar_lea.sflag [#allocation3], %s341
        %s343 = sand.u32 %s36, 1
        %s344 = smul.addr %s343, 8
        %s345 = scalar_lea.vmem [#allocation2], %s344
        // Predicated region
        $region57: #{tpu_custom_call.1} parent=55 // pred_check
          %p346 = pneg %p49
        $region58: #{tpu_custom_call.1} parent=55 // pred_check_branch
          %348 = sbr.rel (%p346) target = $region60
        $region59: #{tpu_custom_call.1} parent=55 // pred_region
          %349 = dma.done %s342, 128
        $region60: #{tpu_custom_call.1} parent=55 // pred_fallthru
          _
        // Predicated region
        $region61: #{tpu_custom_call.1} parent=55 // pred_check
          %p350 = pneg %p70
        $region62: #{tpu_custom_call.1} parent=55 // pred_check_branch
          %352 = sbr.rel (%p350) target = $region64
        $region63: #{tpu_custom_call.1} parent=55 // pred_region
          %353 = dma.done [#allocation6], 512
        $region64: #{tpu_custom_call.1} parent=55 // pred_fallthru
          _
        // Predicated region
        $region65: #{tpu_custom_call.1} parent=55 // pred_check
          %p354 = pneg %p112
        $region66: #{tpu_custom_call.1} parent=55 // pred_check_branch
          %356 = sbr.rel (%p354) target = $region68
        $region67: #{tpu_custom_call.1} parent=55 // pred_region
          %357 = dma.done [#allocation6], 2048
        $region68: #{tpu_custom_call.1} parent=55 // pred_fallthru
          _
        // Predicated region
        $region69: #{tpu_custom_call.1} parent=55 // pred_check
          %p358 = pneg %p154
        $region70: #{tpu_custom_call.1} parent=55 // pred_check_branch
          %360 = sbr.rel (%p358) target = $region72
        $region71: #{tpu_custom_call.1} parent=55 // pred_region
          %361 = dma.done [#allocation9], 2048
        $region72: #{tpu_custom_call.1} parent=55 // pred_fallthru
          _
        %s362 = sand.u32 %s36, 1
        %s363 = scalar_lea.sflag [#allocation3], %s362
        %s364 = sand.u32 %s36, 1
        %s365 = smul.addr %s364, 8
        %s366 = scalar_lea.vmem [#allocation2], %s365
        %p367 = pneg %p49
        %p368 = pneg %p46
        %p369 = pneg %p70
        %p370 = pneg %p67
        %p371 = pneg %p91
        %p372 = pneg %p88
        %p373 = pneg %p112
        %p374 = pneg %p109
        %p375 = pneg %p133
        %p376 = pneg %p130
        %p377 = pneg %p154
        %p378 = pneg %p151
        %p379 = pneg %p175
        %p380 = pneg %p172
        %p381 = pneg %p196
        %p382 = pneg %p193
        %p383 = pneg %p217
        %p384 = pneg %p214
        %p385 = pneg %p243
        %p386 = pneg %p240
        %s387 = sand.u32 %s230, 1
        %s388 = scalar_lea.sflag [#allocation4], %s387
        %s389 = sand.u32 %s230, 1
        %s390 = smul.addr %s389, 8
        %s391 = scalar_lea.vmem [#allocation10], %s390
        %v392 = vld [vmem:[%s345] sm:$0xff]
        %v393 = vld [vmem:[#allocation5] sm:$0xff]
        %v394 = vld [vmem:[#allocation5 + $0x8] sm:$0xff]
        %v395 = vld [vmem:[#allocation5 + $0x10] sm:$0xff]
        %v396 = vld [vmem:[#allocation5 + $0x18] sm:$0xff]
        %v397 = vld [vmem:[%s2] sm:$0x1]
        %v399 = vlaneseq
        %v400 = vshrl.u32 %v399, 7
        %v401 = vsub.s32 0, %v400
        %v402 = vrot.slane %v397, %v401
        %vm404 = vcmask 261120
        %v406 = vsel %vm404, %v392, 0
        %408 = vmatprep.subr.mxu0 0.0
        %409 = vmatpush1.msra.mxu0 0.0
        %410 = vmatprep.subr.mxu0 0.0
        %411 = vmatpush1.msra.mxu0 0.0
        %412 = vmatprep.subr.mxu0 0.0
        %413 = vmatpush1.msra.mxu0 0.0
        %414 = vmatprep.subr.mxu0 0.0
        %415 = vmatpush1.msra.mxu0 0.0
        %416 = vmatprep.subr.mxu0 0.0
        %417 = vmatpush1.msra.mxu0 0.0
        %418 = vmatprep.subr.mxu0 0.0
        %419 = vmatpush1.msra.mxu0 0.0
        %420 = vmatprep.subr.mxu0 0.0
        %421 = vmatpush1.msra.mxu0 0.0
        %422 = vmatprep.subr.mxu0 0.0
        %423 = vmatpush1.msra.mxu0 0.0
        %424 = vmatprep.subr.mxu0 0.0
        %425 = vmatpush1.msra.mxu0 0.0
        %426 = vmatprep.subr.mxu0 0.0
        %427 = vmatpush1.msra.mxu0 0.0
        %428 = vmatprep.subr.mxu0 0.0
        %429 = vmatpush1.msra.mxu0 0.0
        %430 = vmatprep.subr.mxu0 0.0
        %431 = vmatpush1.msra.mxu0 0.0
        %432 = vmatprep.subr.mxu0 0.0
        %433 = vmatpush1.msra.mxu0 %v396
        %434 = vmatprep.subr.mxu0 0.0
        %435 = vmatpush1.msra.mxu0 %v395
        %436 = vmatprep.subr.mxu0 0.0
        %437 = vmatpush1.msra.mxu0 %v394
        %438 = vmatprep.subr.mxu0 0.0
        %439 = vmatpush1.msra.mxu0 %v393
        %440 = vmatprep.subr.mxu0 0.0
        %441 = vmatpush2.msra.mxu0 0.0
        %442 = vmatprep.subr.mxu0 0.0
        %443 = vmatpush2.msra.mxu0 0.0
        %444 = vmatprep.subr.mxu0 0.0
        %445 = vmatpush2.msra.mxu0 0.0
        %446 = vmatprep.subr.mxu0 0.0
        %447 = vmatpush2.msra.mxu0 0.0
        %448 = vmatprep.subr.mxu0 0.0
        %449 = vmatpush2.msra.mxu0 0.0
        %450 = vmatprep.subr.mxu0 0.0
        %451 = vmatpush2.msra.mxu0 0.0
        %452 = vmatprep.subr.mxu0 0.0
        %453 = vmatpush2.msra.mxu0 0.0
        %454 = vmatprep.subr.mxu0 0.0
        %455 = vmatpush2.msra.mxu0 0.0
        %456 = vmatprep.subr.mxu0 0.0
        %457 = vmatpush2.msra.mxu0 0.0
        %458 = vmatprep.subr.mxu0 0.0
        %459 = vmatpush2.msra.mxu0 0.0
        %460 = vmatprep.subr.mxu0 0.0
        %461 = vmatpush2.msra.mxu0 0.0
        %462 = vmatprep.subr.mxu0 0.0
        %463 = vmatpush2.msra.mxu0 0.0
        %464 = vmatprep.subr.mxu0 0.0
        %465 = vmatpush2.msra.mxu0 0.0
        %466 = vmatprep.subr.mxu0 0.0
        %467 = vmatpush2.msra.mxu0 0.0
        %468 = vmatprep.subr.mxu0 0.0
        %469 = vmatpush2.msra.mxu0 0.0
        %470 = vmatprep.subr.mxu0 0.0
        %471 = vmatpush2.msra.mxu0 0.0
        %472 = vmatprep.mubr.f32.mxu0 0.0
        %473 = vmatmul.mubr.f32.gmra.mxu0 %v406
        %v474 = vpop.f32.mrf.mxu0
        %v475 = vadd.f32 %v402, %v474
        %v476 = vpop.f32.mrf.mxu0
        %477 = vdwg.mxu0
        %v478 = vmax.f32 %v475, 0.0
        %v479 = vld [vmem:[#allocation7] sm:$0xff]
        %v480 = vld [vmem:[#allocation7 + $0x8] sm:$0xff]
        %v481 = vld [vmem:[#allocation7 + $0x10] sm:$0xff]
        %v482 = vld [vmem:[#allocation7 + $0x18] sm:$0xff]
        %v483 = vld [vmem:[#allocation7 + $0x20] sm:$0xff]
        %v484 = vld [vmem:[#allocation7 + $0x28] sm:$0xff]
        %v485 = vld [vmem:[#allocation7 + $0x30] sm:$0xff]
        %v486 = vld [vmem:[#allocation7 + $0x38] sm:$0xff]
        %v487 = vld [vmem:[#allocation7 + $0x40] sm:$0xff]
        %v488 = vld [vmem:[#allocation7 + $0x48] sm:$0xff]
        %v489 = vld [vmem:[#allocation7 + $0x50] sm:$0xff]
        %v490 = vld [vmem:[#allocation7 + $0x58] sm:$0xff]
        %v491 = vld [vmem:[#allocation7 + $0x60] sm:$0xff]
        %v492 = vld [vmem:[#allocation7 + $0x68] sm:$0xff]
        %v493 = vld [vmem:[#allocation7 + $0x70] sm:$0xff]
        %v494 = vld [vmem:[#allocation7 + $0x78] sm:$0xff]
        %v495 = vld [vmem:[%s4] sm:$0x1]
        %v497 = vlaneseq
        %v498 = vshrl.u32 %v497, 7
        %v499 = vsub.s32 0, %v498
        %v500 = vrot.slane %v495, %v499
        %502 = vmatprep.subr.mxu0 0.0
        %503 = vmatpush1.msra.mxu0 %v494
        %504 = vmatprep.subr.mxu0 0.0
        %505 = vmatpush1.msra.mxu0 %v493
        %506 = vmatprep.subr.mxu0 0.0
        %507 = vmatpush1.msra.mxu0 %v492
        %508 = vmatprep.subr.mxu0 0.0
        %509 = vmatpush1.msra.mxu0 %v491
        %510 = vmatprep.subr.mxu0 0.0
        %511 = vmatpush1.msra.mxu0 %v490
        %512 = vmatprep.subr.mxu0 0.0
        %513 = vmatpush1.msra.mxu0 %v489
        %514 = vmatprep.subr.mxu0 0.0
        %515 = vmatpush1.msra.mxu0 %v488
        %516 = vmatprep.subr.mxu0 0.0
        %517 = vmatpush1.msra.mxu0 %v487
        %518 = vmatprep.subr.mxu0 0.0
        %519 = vmatpush1.msra.mxu0 %v486
        %520 = vmatprep.subr.mxu0 0.0
        %521 = vmatpush1.msra.mxu0 %v485
        %522 = vmatprep.subr.mxu0 0.0
        %523 = vmatpush1.msra.mxu0 %v484
        %524 = vmatprep.subr.mxu0 0.0
        %525 = vmatpush1.msra.mxu0 %v483
        %526 = vmatprep.subr.mxu0 0.0
        %527 = vmatpush1.msra.mxu0 %v482
        %528 = vmatprep.subr.mxu0 0.0
        %529 = vmatpush1.msra.mxu0 %v481
        %530 = vmatprep.subr.mxu0 0.0
        %531 = vmatpush1.msra.mxu0 %v480
        %532 = vmatprep.subr.mxu0 0.0
        %533 = vmatpush1.msra.mxu0 %v479
        %534 = vmatprep.subr.mxu0 0.0
        %535 = vmatpush2.msra.mxu0 0.0
        %536 = vmatprep.subr.mxu0 0.0
        %537 = vmatpush2.msra.mxu0 0.0
        %538 = vmatprep.subr.mxu0 0.0
        %539 = vmatpush2.msra.mxu0 0.0
        %540 = vmatprep.subr.mxu0 0.0
        %541 = vmatpush2.msra.mxu0 0.0
        %542 = vmatprep.subr.mxu0 0.0
        %543 = vmatpush2.msra.mxu0 0.0
        %544 = vmatprep.subr.mxu0 0.0
        %545 = vmatpush2.msra.mxu0 0.0
        %546 = vmatprep.subr.mxu0 0.0
        %547 = vmatpush2.msra.mxu0 0.0
        %548 = vmatprep.subr.mxu0 0.0
        %549 = vmatpush2.msra.mxu0 0.0
        %550 = vmatprep.subr.mxu0 0.0
        %551 = vmatpush2.msra.mxu0 0.0
        %552 = vmatprep.subr.mxu0 0.0
        %553 = vmatpush2.msra.mxu0 0.0
        %554 = vmatprep.subr.mxu0 0.0
        %555 = vmatpush2.msra.mxu0 0.0
        %556 = vmatprep.subr.mxu0 0.0
        %557 = vmatpush2.msra.mxu0 0.0
        %558 = vmatprep.subr.mxu0 0.0
        %559 = vmatpush2.msra.mxu0 0.0
        %560 = vmatprep.subr.mxu0 0.0
        %561 = vmatpush2.msra.mxu0 0.0
        %562 = vmatprep.subr.mxu0 0.0
        %563 = vmatpush2.msra.mxu0 0.0
        %564 = vmatprep.subr.mxu0 0.0
        %565 = vmatpush2.msra.mxu0 0.0
        %566 = vmatprep.mubr.f32.mxu0 0.0
        %567 = vmatmul.mubr.f32.gmra.mxu0 %v478
        %v568 = vpop.f32.mrf.mxu0
        %v569 = vadd.f32 %v500, %v568
        %v570 = vpop.f32.mrf.mxu0
        %571 = vdwg.mxu0
        %v572 = vmax.f32 %v569, 0.0
        %v573 = vld [vmem:[#allocation8] sm:$0xff]
        %v574 = vld [vmem:[#allocation8 + $0x8] sm:$0xff]
        %v575 = vld [vmem:[#allocation8 + $0x10] sm:$0xff]
        %v576 = vld [vmem:[#allocation8 + $0x18] sm:$0xff]
        %v577 = vld [vmem:[#allocation8 + $0x20] sm:$0xff]
        %v578 = vld [vmem:[#allocation8 + $0x28] sm:$0xff]
        %v579 = vld [vmem:[#allocation8 + $0x30] sm:$0xff]
        %v580 = vld [vmem:[#allocation8 + $0x38] sm:$0xff]
        %v581 = vld [vmem:[#allocation8 + $0x40] sm:$0xff]
        %v582 = vld [vmem:[#allocation8 + $0x48] sm:$0xff]
        %v583 = vld [vmem:[#allocation8 + $0x50] sm:$0xff]
        %v584 = vld [vmem:[#allocation8 + $0x58] sm:$0xff]
        %v585 = vld [vmem:[#allocation8 + $0x60] sm:$0xff]
        %v586 = vld [vmem:[#allocation8 + $0x68] sm:$0xff]
        %v587 = vld [vmem:[#allocation8 + $0x70] sm:$0xff]
        %v588 = vld [vmem:[#allocation8 + $0x78] sm:$0xff]
        %v589 = vld [vmem:[%s6] sm:$0x1]
        %v591 = vlaneseq
        %v592 = vshrl.u32 %v591, 7
        %v593 = vsub.s32 0, %v592
        %v594 = vrot.slane %v589, %v593
        %596 = vmatprep.subr.mxu0 0.0
        %597 = vmatpush1.msra.mxu0 %v588
        %598 = vmatprep.subr.mxu0 0.0
        %599 = vmatpush1.msra.mxu0 %v587
        %600 = vmatprep.subr.mxu0 0.0
        %601 = vmatpush1.msra.mxu0 %v586
        %602 = vmatprep.subr.mxu0 0.0
        %603 = vmatpush1.msra.mxu0 %v585
        %604 = vmatprep.subr.mxu0 0.0
        %605 = vmatpush1.msra.mxu0 %v584
        %606 = vmatprep.subr.mxu0 0.0
        %607 = vmatpush1.msra.mxu0 %v583
        %608 = vmatprep.subr.mxu0 0.0
        %609 = vmatpush1.msra.mxu0 %v582
        %610 = vmatprep.subr.mxu0 0.0
        %611 = vmatpush1.msra.mxu0 %v581
        %612 = vmatprep.subr.mxu0 0.0
        %613 = vmatpush1.msra.mxu0 %v580
        %614 = vmatprep.subr.mxu0 0.0
        %615 = vmatpush1.msra.mxu0 %v579
        %616 = vmatprep.subr.mxu0 0.0
        %617 = vmatpush1.msra.mxu0 %v578
        %618 = vmatprep.subr.mxu0 0.0
        %619 = vmatpush1.msra.mxu0 %v577
        %620 = vmatprep.subr.mxu0 0.0
        %621 = vmatpush1.msra.mxu0 %v576
        %622 = vmatprep.subr.mxu0 0.0
        %623 = vmatpush1.msra.mxu0 %v575
        %624 = vmatprep.subr.mxu0 0.0
        %625 = vmatpush1.msra.mxu0 %v574
        %626 = vmatprep.subr.mxu0 0.0
        %627 = vmatpush1.msra.mxu0 %v573
        %628 = vmatprep.subr.mxu0 0.0
        %629 = vmatpush2.msra.mxu0 0.0
        %630 = vmatprep.subr.mxu0 0.0
        %631 = vmatpush2.msra.mxu0 0.0
        %632 = vmatprep.subr.mxu0 0.0
        %633 = vmatpush2.msra.mxu0 0.0
        %634 = vmatprep.subr.mxu0 0.0
        %635 = vmatpush2.msra.mxu0 0.0
        %636 = vmatprep.subr.mxu0 0.0
        %637 = vmatpush2.msra.mxu0 0.0
        %638 = vmatprep.subr.mxu0 0.0
        %639 = vmatpush2.msra.mxu0 0.0
        %640 = vmatprep.subr.mxu0 0.0
        %641 = vmatpush2.msra.mxu0 0.0
        %642 = vmatprep.subr.mxu0 0.0
        %643 = vmatpush2.msra.mxu0 0.0
        %644 = vmatprep.subr.mxu0 0.0
        %645 = vmatpush2.msra.mxu0 0.0
        %646 = vmatprep.subr.mxu0 0.0
        %647 = vmatpush2.msra.mxu0 0.0
        %648 = vmatprep.subr.mxu0 0.0
        %649 = vmatpush2.msra.mxu0 0.0
        %650 = vmatprep.subr.mxu0 0.0
        %651 = vmatpush2.msra.mxu0 0.0
        %652 = vmatprep.subr.mxu0 0.0
        %653 = vmatpush2.msra.mxu0 0.0
        %654 = vmatprep.subr.mxu0 0.0
        %655 = vmatpush2.msra.mxu0 0.0
        %656 = vmatprep.subr.mxu0 0.0
        %657 = vmatpush2.msra.mxu0 0.0
        %658 = vmatprep.subr.mxu0 0.0
        %659 = vmatpush2.msra.mxu0 0.0
        %660 = vmatprep.mubr.f32.mxu0 0.0
        %661 = vmatmul.mubr.f32.gmra.mxu0 %v572
        %v662 = vpop.f32.mrf.mxu0
        %v663 = vadd.f32 %v594, %v662
        %v664 = vpop.f32.mrf.mxu0
        %665 = vdwg.mxu0
        %v666 = vld [vmem:[%s7] sm:$0x1]
        %v667 = vld [vmem:[%s8] sm:$0x1]
        %668 = vadd.xlane.f32.xlu0 %v663
        %v669 = vpop.xlane.xlu0 %668
        %v670 = vmul.f32 %v669, 0.03125
        %v671 = vsub.f32 %v663, %v670
        %v672 = vlaneseq
        %v673 = vand.u32 %v672, 127
        %vm674 = vcmp.lt.s32.totalorder %v673, 32
        %v675 = vsel %vm674, %v671, 0.0
        %v676 = vmul.f32 %v675, %v675
        %677 = vadd.xlane.f32.xlu0 %v676
        %v678 = vpop.xlane.xlu0 %677
        %v679 = vmul.f32 %v678, 0.03125
        %v680 = vadd.f32 %v679, 1e-05
        %v681 = vrsqrt.pop %v680
        %v682 = vmul.f32 %v675, %v681
        %v684 = vlaneseq
        %v685 = vshrl.u32 %v684, 7
        %v686 = vsub.s32 0, %v685
        %v687 = vrot.slane %v666, %v686
        %v689 = vmul.f32 %v682, %v687
        %v691 = vlaneseq
        %v692 = vshrl.u32 %v691, 7
        %v693 = vsub.s32 0, %v692
        %v694 = vrot.slane %v667, %v693
        %v696 = vadd.f32 %v689, %v694
        %697 = vst [vmem:[%s391] sm:$0xff] %v696
        %s698 = sand.u32 %s230, 1
        %s699 = scalar_lea.sflag [#allocation4], %s698
        %s700 = sand.u32 %s230, 1
        %s701 = smul.addr %s700, 8
        %s702 = scalar_lea.vmem [#allocation10], %s701
        // Predicated region
        $region73: #{tpu_custom_call.1} parent=55 // pred_check
          %p703 = pneg %p240
        $region74: #{tpu_custom_call.1} parent=55 // pred_check_branch
          %705 = sbr.rel (%p703) target = $region76
        $region75: #{tpu_custom_call.1} parent=55 // pred_region
          %s707 = ssub.s32 128, 128
          %708 = vsyncadd %s699, %s707
          %s709 = smul.addr %s28, 128
          %s710 = scalar_lea.hbm %s9, %s709
          %s712 = sshll.u32 %s702, 4
          %s713 = int_to_ptr.vmem [resolvable:$true] %s712
          %715 = dma.vmem_to_hbm [thread:$0]  %s713, 128, %s710, %s699
        $region76: #{tpu_custom_call.1} parent=55 // pred_fallthru
          _
      $region56: #{tpu_custom_call.1} parent=5 // pred_fallthru
        _
      %p716 = scmp.le.s32.totalorder 2, %s23
      // Predicated region
      $region77: #{tpu_custom_call.1} parent=5 // pred_check
        %p717 = pneg %p716
      $region78: #{tpu_custom_call.1} parent=5 // pred_check_branch
        %719 = sbr.rel (%p717) target = $region80
      $region79: #{tpu_custom_call.1} parent=5 // pred_region
        %s720 = ssub.s32 %s23, 2
        // Predicated region
        $region81: #{tpu_custom_call.1} parent=79 // pred_check
          %p721 = pneg %p246
        $region82: #{tpu_custom_call.1} parent=79 // pred_check_branch
          %723 = sbr.rel (%p721) target = $region84
        $region83: #{tpu_custom_call.1} parent=79 // pred_region
          %s724 = sand.u32 %s231, 1
          %s725 = scalar_lea.sflag [#allocation4], %s724
          %s726 = sand.u32 %s231, 1
          %s727 = smul.addr %s726, 8
          %s728 = scalar_lea.vmem [#allocation10], %s727
          %729 = dma.done %s725, 128
        $region84: #{tpu_custom_call.1} parent=79 // pred_fallthru
          _
      $region80: #{tpu_custom_call.1} parent=5 // pred_fallthru
        _
    $region6: #{tpu_custom_call.1} parent=1 // loop_footer
      %s27 = sadd.s32 1, %s23
    $region7: #{tpu_custom_call.1} parent=1 // loop_footer_branch
      %22 = sbr.rel target = $region3
    $region8: #{tpu_custom_call.1} parent=1 // loop_exit
      _
    %730 = vsyncpa [#allocation3], 1
    %s731 = scalar_lea.sflag [#allocation3], 1
    %732 = vsyncpa %s731, 1
    %733 = vsyncpa [#allocation6], 1
    %734 = vsyncpa [#allocation9], 1
    %735 = vsyncpa [#allocation4], 1
    %s736 = scalar_lea.sflag [#allocation4], 1
    %737 = vsyncpa %s736, 1

</llo_original>
